<compile_context>
chip_gen: v7x
topology: tpu7x:2x2x1
jax: 0.10.0
libtpu: 0.0.40
codegen_flags: <defaults>
</compile_context>

<pallas_src>
import jax
import jax.numpy as jnp
from jax import lax
from jax.experimental import pallas as pl
from jax.experimental.pallas import tpu as pltpu

# ----- model config (small, consistent with the module's __init__) -----
VOCAB = 50        # input_dim
EMBED = 16        # embed_dim
HIDDEN = 32       # hidden_dim
OUT = 1           # output_dim
PAD_IDX = 0       # padding_idx
B = 2             # batch
T = 8             # max sequence length


def lstm_classifier_kernel(xcat_ref, len_ref, wx_ref, wh_ref, b_ref,
                           fcw_ref, fcb_ref, out_ref):
    """Fused bidirectional single-layer LSTM + FC + sigmoid.

    xcat_ref : (T*Bp, 2E) f32  rows grouped by timestep t (Bp rows each);
                               cols [0:E]  = x_t       (forward-direction input)
                               cols [E:2E] = x_{T-1-t} (backward-direction input)
    len_ref  : (Bp, 1)    i32  valid length per (padded) batch row
    wx_ref   : (2E, 8H)   f32  block-diag input->gate weights, gate cols
                               interleaved as [i_f,i_b, f_f,f_b, g_f,g_b, o_f,o_b]
    wh_ref   : (2H, 8H)   f32  block-diag hidden->gate weights, same col layout;
                               rows [0:H] act on h_fwd, rows [H:2H] on h_bwd
    b_ref    : (1, 8H)    f32  combined bias (b_ih + b_hh), same col layout
    fcw_ref  : (2H, O)    f32  final linear weight, pre-transposed,
                               rows [0:H] for h_fwd, rows [H:2H] for h_bwd
    fcb_ref  : (1, O)     f32  final linear bias
    out_ref  : (Bp, O)    f32  sigmoid(logits)
    """
    TB, _twoE = xcat_ref.shape
    H2 = wh_ref.shape[0]                     # 2H
    H = H2 // 2
    Bp = len_ref.shape[0]
    T_ = TB // Bp

    lengths = len_ref[...]                   # (Bp, 1) int32
    wh = wh_ref[...]                         # (2H, 8H)

    # --- hoisted input projection: all timesteps, both directions, one MXU pass ---
    xg = (jnp.dot(xcat_ref[...], wx_ref[...], preferred_element_type=jnp.float32)
          + b_ref[...])                      # (T*Bp, 8H)

    # column -> direction map (loop-invariant): first H of each 2H state slab = fwd
    col_is_fwd = lax.broadcasted_iota(jnp.int32, (1, H2), 1) < H   # (1, 2H) bool

    # state carried as [h_fwd | h_bwd] along the lane dim
    h = jnp.zeros((Bp, H2), jnp.float32)
    c = jnp.zeros((Bp, H2), jnp.float32)

    # --- fully unrolled recurrence (T is static and small) ---
    for t in range(T_):
        gates = (xg[t * Bp:(t + 1) * Bp, :]
                 + jnp.dot(h, wh, preferred_element_type=jnp.float32))   # (Bp, 8H)
        s = jax.nn.sigmoid(gates)                     # full-width: covers i, f, o
        i_g = s[:, 0:2 * H]                           # [i_f | i_b]
        f_g = s[:, 2 * H:4 * H]                       # [f_f | f_b]
        o_g = s[:, 6 * H:8 * H]                       # [o_f | o_b]
        g_g = jnp.tanh(gates[:, 4 * H:6 * H])         # [g_f | g_b]

        c_new = f_g * c + i_g * g_g
        h_new = o_g * jnp.tanh(c_new)

        # per-direction time position: fwd uses t, bwd uses T-1-t
        pos = jnp.where(col_is_fwd, jnp.int32(t), jnp.int32(T_ - 1 - t))  # (1, 2H)
        mask = pos < lengths                                              # (Bp, 2H)
        h = jnp.where(mask, h_new, h)
        c = jnp.where(mask, c_new, c)

    # --- fc(cat(h_fwd, h_bwd)) + sigmoid; h already stores [h_fwd | h_bwd] ---
    logits = (jnp.dot(h, fcw_ref[...], preferred_element_type=jnp.float32)
              + fcb_ref[...])                          # (Bp, O)
    out_ref[...] = jax.nn.sigmoid(logits)


def init_params(key):
    k = 1.0 / jnp.sqrt(jnp.float32(HIDDEN))
    ks = jax.random.split(key, 12)
    u = lambda kk, shape, bound: jax.random.uniform(
        kk, shape, jnp.float32, minval=-bound, maxval=bound)

    emb = jax.random.normal(ks[0], (VOCAB, EMBED), jnp.float32)
    emb = emb.at[PAD_IDX].set(0.0)               # padding_idx row zeroed

    params = {
        "embedding": emb,
        # forward direction (PyTorch layouts: (4H,E), (4H,H), gate order i,f,g,o)
        "w_ih_f": u(ks[1], (4 * HIDDEN, EMBED), k),
        "w_hh_f": u(ks[2], (4 * HIDDEN, HIDDEN), k),
        "b_f": (u(ks[3], (1, 4 * HIDDEN), k) + u(ks[4], (1, 4 * HIDDEN), k)),
        # backward direction
        "w_ih_b": u(ks[5], (4 * HIDDEN, EMBED), k),
        "w_hh_b": u(ks[6], (4 * HIDDEN, HIDDEN), k),
        "b_b": (u(ks[7], (1, 4 * HIDDEN), k) + u(ks[8], (1, 4 * HIDDEN), k)),
        # final linear
        "fc_w": u(ks[9], (OUT, 2 * HIDDEN), 1.0 / jnp.sqrt(jnp.float32(2 * HIDDEN))),
        "fc_b": u(ks[10], (1, OUT), 1.0 / jnp.sqrt(jnp.float32(2 * HIDDEN))),
    }
    return params


def pack_weights(params):
    """Host-side weight packing: pre-transpose and fuse fwd/bwd into block-diagonal
    weights with per-gate interleaved columns [i_f,i_b, f_f,f_b, g_f,g_b, o_f,o_b]."""
    H = HIDDEN

    wx_f = params["w_ih_f"].T                # (E, 4H)
    wx_b = params["w_ih_b"].T                # (E, 4H)
    wh_f = params["w_hh_f"].T                # (H, 4H)
    wh_b = params["w_hh_b"].T                # (H, 4H)

    def block_diag_interleave(wf, wb):
        rf, rb = wf.shape[0], wb.shape[0]
        w = jnp.zeros((rf + rb, 8 * H), jnp.float32)
        for j in range(4):                   # gates i, f, g, o
            w = w.at[:rf, (2 * j) * H:(2 * j + 1) * H].set(wf[:, j * H:(j + 1) * H])
            w = w.at[rf:, (2 * j + 1) * H:(2 * j + 2) * H].set(wb[:, j * H:(j + 1) * H])
        return w

    wx = block_diag_interleave(wx_f, wx_b)   # (2E, 8H)
    wh = block_diag_interleave(wh_f, wh_b)   # (2H, 8H)

    bias = jnp.zeros((1, 8 * H), jnp.float32)
    for j in range(4):
        bias = bias.at[:, (2 * j) * H:(2 * j + 1) * H].set(
            params["b_f"][:, j * H:(j + 1) * H])
        bias = bias.at[:, (2 * j + 1) * H:(2 * j + 2) * H].set(
            params["b_b"][:, j * H:(j + 1) * H])

    fcw = params["fc_w"].T                   # (2H, O): rows [0:H]=h_fwd, [H:2H]=h_bwd
    return wx, wh, bias, fcw


def lstm_classifier_forward(tweet, length, params):
    """tweet: (B, T) int32 token ids (batch_first). length: (B,) int32."""
    b, seq_len = tweet.shape
    bp = ((b + 7) // 8) * 8                  # pad batch to sublane multiple

    # Glue: embedding lookup + dropout (eval-mode identity); done in the wrapper
    # (negligible traffic at these sizes; the kernel handles the whole recurrence).
    embeds = params["embedding"][tweet].astype(jnp.float32)        # (B, T, E)
    emb_tm = jnp.transpose(embeds, (1, 0, 2))                      # (T, B, E)
    emb_rev = emb_tm[::-1]                                         # row t = x_{T-1-t}
    xcat = jnp.concatenate([emb_tm, emb_rev], axis=-1)             # (T, B, 2E)
    if bp != b:
        xcat = jnp.pad(xcat, ((0, 0), (0, bp - b), (0, 0)))
    xcat = xcat.reshape(seq_len * bp, 2 * EMBED)                   # (T*Bp, 2E)

    lengths = length.astype(jnp.int32)
    if bp != b:
        lengths = jnp.pad(lengths, (0, bp - b))                    # pad rows: len 0
    lengths = lengths.reshape(bp, 1)

    wx, wh, bias, fcw = pack_weights(params)
    fcb = params["fc_b"]

    vmem = pl.BlockSpec(memory_space=pltpu.MemorySpace.VMEM)
    out = pl.pallas_call(
        lstm_classifier_kernel,
        out_shape=jax.ShapeDtypeStruct((bp, OUT), jnp.float32),
        in_specs=[vmem] * 7,
        out_specs=vmem,
    )(xcat, lengths, wx, wh, bias, fcw, fcb)
    return out[:b]


if __name__ == "__main__":
    key = jax.random.PRNGKey(0)
    pkey, tkey = jax.random.split(key)
    params = init_params(pkey)

    # Deterministic example inputs: padded token ids + per-sequence lengths.
    lengths = jnp.array([T, 5], dtype=jnp.int32)                   # (B,)
    tweet = jax.random.randint(tkey, (B, T), 1, VOCAB, dtype=jnp.int32)
    pos = jnp.arange(T)[None, :]
    tweet = jnp.where(pos < lengths[:, None], tweet, PAD_IDX)      # pad tail

    probs = lstm_classifier_forward(tweet, lengths, params)
    probs = jax.block_until_ready(probs)

    assert probs.shape == (B, OUT)
    assert bool(jnp.all(jnp.isfinite(probs)))
    assert bool(jnp.all((probs >= 0.0) & (probs <= 1.0)))
    print("KERNEL_OK")
</pallas_src>

<mosaic_0001>
module attributes {stable_mosaic.version = 11 : i64} {
  func.func @lstm_classifier_kernel(%arg0: memref<64x32xf32, #tpu.memory_space<vmem>>, %arg1: memref<8x1xi32, #tpu.memory_space<vmem>>, %arg2: memref<32x256xf32, #tpu.memory_space<vmem>>, %arg3: memref<64x256xf32, #tpu.memory_space<vmem>>, %arg4: memref<1x256xf32, #tpu.memory_space<vmem>>, %arg5: memref<64x1xf32, #tpu.memory_space<vmem>>, %arg6: memref<1x1xf32, #tpu.memory_space<vmem>>, %arg7: memref<8x1xf32, #tpu.memory_space<vmem>>) attributes {dimension_semantics = [], scalar_prefetch = 0 : i64, scratch_operands = 0 : i64, tpu.core_type = #tpu.core_type<tc>} {
    %c0 = arith.constant 0 : index
    %c0_0 = arith.constant 0 : index
    %0 = vector.load %arg1[%c0, %c0_0] : memref<8x1xi32, #tpu.memory_space<vmem>>, vector<8x1xi32>
    %c0_1 = arith.constant 0 : index
    %c0_2 = arith.constant 0 : index
    %1 = vector.load %arg3[%c0_1, %c0_2] : memref<64x256xf32, #tpu.memory_space<vmem>>, vector<64x256xf32>
    %c0_3 = arith.constant 0 : index
    %c0_4 = arith.constant 0 : index
    %2 = vector.load %arg0[%c0_3, %c0_4] : memref<64x32xf32, #tpu.memory_space<vmem>>, vector<64x32xf32>
    %c0_5 = arith.constant 0 : index
    %c0_6 = arith.constant 0 : index
    %3 = vector.load %arg2[%c0_5, %c0_6] : memref<32x256xf32, #tpu.memory_space<vmem>>, vector<32x256xf32>
    %cst = arith.constant dense<0.000000e+00> : vector<64x256xf32>
    %4 = tpu.matmul %2, %3, %cst {dimension_numbers = #tpu.dot_dimension_numbers<[1], [0], [0], [1], [0, 0, 1, 1], [], []>} : vector<64x32xf32>, vector<32x256xf32>, vector<64x256xf32> -> vector<64x256xf32>
    %c0_7 = arith.constant 0 : index
    %c0_8 = arith.constant 0 : index
    %5 = vector.load %arg4[%c0_7, %c0_8] : memref<1x256xf32, #tpu.memory_space<vmem>>, vector<1x256xf32>
    %6 = vector.broadcast %5 : vector<1x256xf32> to vector<64x256xf32>
    %7 = arith.addf %4, %6 : vector<64x256xf32>
    %8 = tpu.iota {dimensions = array<i32: 1>} : vector<1x64xi32>
    %c32_i32 = arith.constant 32 : i32
    %9 = vector.broadcast %c32_i32 : i32 to vector<1x64xi32>
    %10 = arith.cmpi slt, %8, %9 : vector<1x64xi32>
    %cst_9 = arith.constant 0.000000e+00 : f32
    %11 = vector.broadcast %cst_9 : f32 to vector<8x64xf32>
    %cst_10 = arith.constant 0.000000e+00 : f32
    %12 = vector.broadcast %cst_10 : f32 to vector<8x64xf32>
    %13 = vector.extract_strided_slice %7 {offsets = [0, 0], sizes = [8, 256], strides = [1, 1]} : vector<64x256xf32> to vector<8x256xf32>
    %cst_11 = arith.constant dense<0.000000e+00> : vector<8x256xf32>
    %14 = tpu.matmul %11, %1, %cst_11 {dimension_numbers = #tpu.dot_dimension_numbers<[1], [0], [0], [1], [0, 0, 1, 1], [], []>} : vector<8x64xf32>, vector<64x256xf32>, vector<8x256xf32> -> vector<8x256xf32>
    %15 = arith.addf %13, %14 : vector<8x256xf32>
    %16 = arith.negf %15 : vector<8x256xf32>
    %17 = math.exp %16 : vector<8x256xf32>
    %cst_12 = arith.constant 1.000000e+00 : f32
    %18 = vector.broadcast %cst_12 : f32 to vector<8x256xf32>
    %19 = arith.addf %18, %17 : vector<8x256xf32>
    %20 = arith.divf %18, %19 : vector<8x256xf32>
    %21 = vector.extract_strided_slice %20 {offsets = [0, 0], sizes = [8, 64], strides = [1, 1]} : vector<8x256xf32> to vector<8x64xf32>
    %22 = vector.extract_strided_slice %20 {offsets = [0, 64], sizes = [8, 64], strides = [1, 1]} : vector<8x256xf32> to vector<8x64xf32>
    %23 = vector.extract_strided_slice %20 {offsets = [0, 192], sizes = [8, 64], strides = [1, 1]} : vector<8x256xf32> to vector<8x64xf32>
    %24 = vector.extract_strided_slice %15 {offsets = [0, 128], sizes = [8, 64], strides = [1, 1]} : vector<8x256xf32> to vector<8x64xf32>
    %25 = math.tanh %24 : vector<8x64xf32>
    %26 = arith.mulf %22, %12 : vector<8x64xf32>
    %27 = arith.mulf %21, %25 : vector<8x64xf32>
    %28 = arith.addf %26, %27 : vector<8x64xf32>
    %29 = math.tanh %28 : vector<8x64xf32>
    %30 = arith.mulf %23, %29 : vector<8x64xf32>
    %c0_i32 = arith.constant 0 : i32
    %c7_i32 = arith.constant 7 : i32
    %31 = vector.broadcast %c0_i32 : i32 to vector<1x64xi32>
    %32 = vector.broadcast %c7_i32 : i32 to vector<1x64xi32>
    %33 = arith.select %10, %31, %32 : vector<1x64xi1>, vector<1x64xi32>
    %34 = vector.broadcast %33 : vector<1x64xi32> to vector<8x64xi32>
    %35 = vector.broadcast %0 : vector<8x1xi32> to vector<8x64xi32>
    %36 = arith.cmpi slt, %34, %35 : vector<8x64xi32>
    %37 = arith.select %36, %30, %11 : vector<8x64xi1>, vector<8x64xf32>
    %38 = arith.select %36, %28, %12 : vector<8x64xi1>, vector<8x64xf32>
    %39 = vector.extract_strided_slice %7 {offsets = [8, 0], sizes = [8, 256], strides = [1, 1]} : vector<64x256xf32> to vector<8x256xf32>
    %cst_13 = arith.constant dense<0.000000e+00> : vector<8x256xf32>
    %40 = tpu.matmul %37, %1, %cst_13 {dimension_numbers = #tpu.dot_dimension_numbers<[1], [0], [0], [1], [0, 0, 1, 1], [], []>} : vector<8x64xf32>, vector<64x256xf32>, vector<8x256xf32> -> vector<8x256xf32>
    %41 = arith.addf %39, %40 : vector<8x256xf32>
    %42 = arith.negf %41 : vector<8x256xf32>
    %43 = math.exp %42 : vector<8x256xf32>
    %cst_14 = arith.constant 1.000000e+00 : f32
    %44 = vector.broadcast %cst_14 : f32 to vector<8x256xf32>
    %45 = arith.addf %44, %43 : vector<8x256xf32>
    %46 = arith.divf %44, %45 : vector<8x256xf32>
    %47 = vector.extract_strided_slice %46 {offsets = [0, 0], sizes = [8, 64], strides = [1, 1]} : vector<8x256xf32> to vector<8x64xf32>
    %48 = vector.extract_strided_slice %46 {offsets = [0, 64], sizes = [8, 64], strides = [1, 1]} : vector<8x256xf32> to vector<8x64xf32>
    %49 = vector.extract_strided_slice %46 {offsets = [0, 192], sizes = [8, 64], strides = [1, 1]} : vector<8x256xf32> to vector<8x64xf32>
    %50 = vector.extract_strided_slice %41 {offsets = [0, 128], sizes = [8, 64], strides = [1, 1]} : vector<8x256xf32> to vector<8x64xf32>
    %51 = math.tanh %50 : vector<8x64xf32>
    %52 = arith.mulf %48, %38 : vector<8x64xf32>
    %53 = arith.mulf %47, %51 : vector<8x64xf32>
    %54 = arith.addf %52, %53 : vector<8x64xf32>
    %55 = math.tanh %54 : vector<8x64xf32>
    %56 = arith.mulf %49, %55 : vector<8x64xf32>
    %c1_i32 = arith.constant 1 : i32
    %c6_i32 = arith.constant 6 : i32
    %57 = vector.broadcast %c1_i32 : i32 to vector<1x64xi32>
    %58 = vector.broadcast %c6_i32 : i32 to vector<1x64xi32>
    %59 = arith.select %10, %57, %58 : vector<1x64xi1>, vector<1x64xi32>
    %60 = vector.broadcast %59 : vector<1x64xi32> to vector<8x64xi32>
    %61 = vector.broadcast %0 : vector<8x1xi32> to vector<8x64xi32>
    %62 = arith.cmpi slt, %60, %61 : vector<8x64xi32>
    %63 = arith.select %62, %56, %37 : vector<8x64xi1>, vector<8x64xf32>
    %64 = arith.select %62, %54, %38 : vector<8x64xi1>, vector<8x64xf32>
    %65 = vector.extract_strided_slice %7 {offsets = [16, 0], sizes = [8, 256], strides = [1, 1]} : vector<64x256xf32> to vector<8x256xf32>
    %cst_15 = arith.constant dense<0.000000e+00> : vector<8x256xf32>
    %66 = tpu.matmul %63, %1, %cst_15 {dimension_numbers = #tpu.dot_dimension_numbers<[1], [0], [0], [1], [0, 0, 1, 1], [], []>} : vector<8x64xf32>, vector<64x256xf32>, vector<8x256xf32> -> vector<8x256xf32>
    %67 = arith.addf %65, %66 : vector<8x256xf32>
    %68 = arith.negf %67 : vector<8x256xf32>
    %69 = math.exp %68 : vector<8x256xf32>
    %cst_16 = arith.constant 1.000000e+00 : f32
    %70 = vector.broadcast %cst_16 : f32 to vector<8x256xf32>
    %71 = arith.addf %70, %69 : vector<8x256xf32>
    %72 = arith.divf %70, %71 : vector<8x256xf32>
    %73 = vector.extract_strided_slice %72 {offsets = [0, 0], sizes = [8, 64], strides = [1, 1]} : vector<8x256xf32> to vector<8x64xf32>
    %74 = vector.extract_strided_slice %72 {offsets = [0, 64], sizes = [8, 64], strides = [1, 1]} : vector<8x256xf32> to vector<8x64xf32>
    %75 = vector.extract_strided_slice %72 {offsets = [0, 192], sizes = [8, 64], strides = [1, 1]} : vector<8x256xf32> to vector<8x64xf32>
    %76 = vector.extract_strided_slice %67 {offsets = [0, 128], sizes = [8, 64], strides = [1, 1]} : vector<8x256xf32> to vector<8x64xf32>
    %77 = math.tanh %76 : vector<8x64xf32>
    %78 = arith.mulf %74, %64 : vector<8x64xf32>
    %79 = arith.mulf %73, %77 : vector<8x64xf32>
    %80 = arith.addf %78, %79 : vector<8x64xf32>
    %81 = math.tanh %80 : vector<8x64xf32>
    %82 = arith.mulf %75, %81 : vector<8x64xf32>
    %c2_i32 = arith.constant 2 : i32
    %c5_i32 = arith.constant 5 : i32
    %83 = vector.broadcast %c2_i32 : i32 to vector<1x64xi32>
    %84 = vector.broadcast %c5_i32 : i32 to vector<1x64xi32>
    %85 = arith.select %10, %83, %84 : vector<1x64xi1>, vector<1x64xi32>
    %86 = vector.broadcast %85 : vector<1x64xi32> to vector<8x64xi32>
    %87 = vector.broadcast %0 : vector<8x1xi32> to vector<8x64xi32>
    %88 = arith.cmpi slt, %86, %87 : vector<8x64xi32>
    %89 = arith.select %88, %82, %63 : vector<8x64xi1>, vector<8x64xf32>
    %90 = arith.select %88, %80, %64 : vector<8x64xi1>, vector<8x64xf32>
    %91 = vector.extract_strided_slice %7 {offsets = [24, 0], sizes = [8, 256], strides = [1, 1]} : vector<64x256xf32> to vector<8x256xf32>
    %cst_17 = arith.constant dense<0.000000e+00> : vector<8x256xf32>
    %92 = tpu.matmul %89, %1, %cst_17 {dimension_numbers = #tpu.dot_dimension_numbers<[1], [0], [0], [1], [0, 0, 1, 1], [], []>} : vector<8x64xf32>, vector<64x256xf32>, vector<8x256xf32> -> vector<8x256xf32>
    %93 = arith.addf %91, %92 : vector<8x256xf32>
    %94 = arith.negf %93 : vector<8x256xf32>
    %95 = math.exp %94 : vector<8x256xf32>
    %cst_18 = arith.constant 1.000000e+00 : f32
    %96 = vector.broadcast %cst_18 : f32 to vector<8x256xf32>
    %97 = arith.addf %96, %95 : vector<8x256xf32>
    %98 = arith.divf %96, %97 : vector<8x256xf32>
    %99 = vector.extract_strided_slice %98 {offsets = [0, 0], sizes = [8, 64], strides = [1, 1]} : vector<8x256xf32> to vector<8x64xf32>
    %100 = vector.extract_strided_slice %98 {offsets = [0, 64], sizes = [8, 64], strides = [1, 1]} : vector<8x256xf32> to vector<8x64xf32>
    %101 = vector.extract_strided_slice %98 {offsets = [0, 192], sizes = [8, 64], strides = [1, 1]} : vector<8x256xf32> to vector<8x64xf32>
    %102 = vector.extract_strided_slice %93 {offsets = [0, 128], sizes = [8, 64], strides = [1, 1]} : vector<8x256xf32> to vector<8x64xf32>
    %103 = math.tanh %102 : vector<8x64xf32>
    %104 = arith.mulf %100, %90 : vector<8x64xf32>
    %105 = arith.mulf %99, %103 : vector<8x64xf32>
    %106 = arith.addf %104, %105 : vector<8x64xf32>
    %107 = math.tanh %106 : vector<8x64xf32>
    %108 = arith.mulf %101, %107 : vector<8x64xf32>
    %c3_i32 = arith.constant 3 : i32
    %c4_i32 = arith.constant 4 : i32
    %109 = vector.broadcast %c3_i32 : i32 to vector<1x64xi32>
    %110 = vector.broadcast %c4_i32 : i32 to vector<1x64xi32>
    %111 = arith.select %10, %109, %110 : vector<1x64xi1>, vector<1x64xi32>
    %112 = vector.broadcast %111 : vector<1x64xi32> to vector<8x64xi32>
    %113 = vector.broadcast %0 : vector<8x1xi32> to vector<8x64xi32>
    %114 = arith.cmpi slt, %112, %113 : vector<8x64xi32>
    %115 = arith.select %114, %108, %89 : vector<8x64xi1>, vector<8x64xf32>
    %116 = arith.select %114, %106, %90 : vector<8x64xi1>, vector<8x64xf32>
    %117 = vector.extract_strided_slice %7 {offsets = [32, 0], sizes = [8, 256], strides = [1, 1]} : vector<64x256xf32> to vector<8x256xf32>
    %cst_19 = arith.constant dense<0.000000e+00> : vector<8x256xf32>
    %118 = tpu.matmul %115, %1, %cst_19 {dimension_numbers = #tpu.dot_dimension_numbers<[1], [0], [0], [1], [0, 0, 1, 1], [], []>} : vector<8x64xf32>, vector<64x256xf32>, vector<8x256xf32> -> vector<8x256xf32>
    %119 = arith.addf %117, %118 : vector<8x256xf32>
    %120 = arith.negf %119 : vector<8x256xf32>
    %121 = math.exp %120 : vector<8x256xf32>
    %cst_20 = arith.constant 1.000000e+00 : f32
    %122 = vector.broadcast %cst_20 : f32 to vector<8x256xf32>
    %123 = arith.addf %122, %121 : vector<8x256xf32>
    %124 = arith.divf %122, %123 : vector<8x256xf32>
    %125 = vector.extract_strided_slice %124 {offsets = [0, 0], sizes = [8, 64], strides = [1, 1]} : vector<8x256xf32> to vector<8x64xf32>
    %126 = vector.extract_strided_slice %124 {offsets = [0, 64], sizes = [8, 64], strides = [1, 1]} : vector<8x256xf32> to vector<8x64xf32>
    %127 = vector.extract_strided_slice %124 {offsets = [0, 192], sizes = [8, 64], strides = [1, 1]} : vector<8x256xf32> to vector<8x64xf32>
    %128 = vector.extract_strided_slice %119 {offsets = [0, 128], sizes = [8, 64], strides = [1, 1]} : vector<8x256xf32> to vector<8x64xf32>
    %129 = math.tanh %128 : vector<8x64xf32>
    %130 = arith.mulf %126, %116 : vector<8x64xf32>
    %131 = arith.mulf %125, %129 : vector<8x64xf32>
    %132 = arith.addf %130, %131 : vector<8x64xf32>
    %133 = math.tanh %132 : vector<8x64xf32>
    %134 = arith.mulf %127, %133 : vector<8x64xf32>
    %c4_i32_21 = arith.constant 4 : i32
    %c3_i32_22 = arith.constant 3 : i32
    %135 = vector.broadcast %c4_i32_21 : i32 to vector<1x64xi32>
    %136 = vector.broadcast %c3_i32_22 : i32 to vector<1x64xi32>
    %137 = arith.select %10, %135, %136 : vector<1x64xi1>, vector<1x64xi32>
    %138 = vector.broadcast %137 : vector<1x64xi32> to vector<8x64xi32>
    %139 = vector.broadcast %0 : vector<8x1xi32> to vector<8x64xi32>
    %140 = arith.cmpi slt, %138, %139 : vector<8x64xi32>
    %141 = arith.select %140, %134, %115 : vector<8x64xi1>, vector<8x64xf32>
    %142 = arith.select %140, %132, %116 : vector<8x64xi1>, vector<8x64xf32>
    %143 = vector.extract_strided_slice %7 {offsets = [40, 0], sizes = [8, 256], strides = [1, 1]} : vector<64x256xf32> to vector<8x256xf32>
    %cst_23 = arith.constant dense<0.000000e+00> : vector<8x256xf32>
    %144 = tpu.matmul %141, %1, %cst_23 {dimension_numbers = #tpu.dot_dimension_numbers<[1], [0], [0], [1], [0, 0, 1, 1], [], []>} : vector<8x64xf32>, vector<64x256xf32>, vector<8x256xf32> -> vector<8x256xf32>
    %145 = arith.addf %143, %144 : vector<8x256xf32>
    %146 = arith.negf %145 : vector<8x256xf32>
    %147 = math.exp %146 : vector<8x256xf32>
    %cst_24 = arith.constant 1.000000e+00 : f32
    %148 = vector.broadcast %cst_24 : f32 to vector<8x256xf32>
    %149 = arith.addf %148, %147 : vector<8x256xf32>
    %150 = arith.divf %148, %149 : vector<8x256xf32>
    %151 = vector.extract_strided_slice %150 {offsets = [0, 0], sizes = [8, 64], strides = [1, 1]} : vector<8x256xf32> to vector<8x64xf32>
    %152 = vector.extract_strided_slice %150 {offsets = [0, 64], sizes = [8, 64], strides = [1, 1]} : vector<8x256xf32> to vector<8x64xf32>
    %153 = vector.extract_strided_slice %150 {offsets = [0, 192], sizes = [8, 64], strides = [1, 1]} : vector<8x256xf32> to vector<8x64xf32>
    %154 = vector.extract_strided_slice %145 {offsets = [0, 128], sizes = [8, 64], strides = [1, 1]} : vector<8x256xf32> to vector<8x64xf32>
    %155 = math.tanh %154 : vector<8x64xf32>
    %156 = arith.mulf %152, %142 : vector<8x64xf32>
    %157 = arith.mulf %151, %155 : vector<8x64xf32>
    %158 = arith.addf %156, %157 : vector<8x64xf32>
    %159 = math.tanh %158 : vector<8x64xf32>
    %160 = arith.mulf %153, %159 : vector<8x64xf32>
    %c5_i32_25 = arith.constant 5 : i32
    %c2_i32_26 = arith.constant 2 : i32
    %161 = vector.broadcast %c5_i32_25 : i32 to vector<1x64xi32>
    %162 = vector.broadcast %c2_i32_26 : i32 to vector<1x64xi32>
    %163 = arith.select %10, %161, %162 : vector<1x64xi1>, vector<1x64xi32>
    %164 = vector.broadcast %163 : vector<1x64xi32> to vector<8x64xi32>
    %165 = vector.broadcast %0 : vector<8x1xi32> to vector<8x64xi32>
    %166 = arith.cmpi slt, %164, %165 : vector<8x64xi32>
    %167 = arith.select %166, %160, %141 : vector<8x64xi1>, vector<8x64xf32>
    %168 = arith.select %166, %158, %142 : vector<8x64xi1>, vector<8x64xf32>
    %169 = vector.extract_strided_slice %7 {offsets = [48, 0], sizes = [8, 256], strides = [1, 1]} : vector<64x256xf32> to vector<8x256xf32>
    %cst_27 = arith.constant dense<0.000000e+00> : vector<8x256xf32>
    %170 = tpu.matmul %167, %1, %cst_27 {dimension_numbers = #tpu.dot_dimension_numbers<[1], [0], [0], [1], [0, 0, 1, 1], [], []>} : vector<8x64xf32>, vector<64x256xf32>, vector<8x256xf32> -> vector<8x256xf32>
    %171 = arith.addf %169, %170 : vector<8x256xf32>
    %172 = arith.negf %171 : vector<8x256xf32>
    %173 = math.exp %172 : vector<8x256xf32>
    %cst_28 = arith.constant 1.000000e+00 : f32
    %174 = vector.broadcast %cst_28 : f32 to vector<8x256xf32>
    %175 = arith.addf %174, %173 : vector<8x256xf32>
    %176 = arith.divf %174, %175 : vector<8x256xf32>
    %177 = vector.extract_strided_slice %176 {offsets = [0, 0], sizes = [8, 64], strides = [1, 1]} : vector<8x256xf32> to vector<8x64xf32>
    %178 = vector.extract_strided_slice %176 {offsets = [0, 64], sizes = [8, 64], strides = [1, 1]} : vector<8x256xf32> to vector<8x64xf32>
    %179 = vector.extract_strided_slice %176 {offsets = [0, 192], sizes = [8, 64], strides = [1, 1]} : vector<8x256xf32> to vector<8x64xf32>
    %180 = vector.extract_strided_slice %171 {offsets = [0, 128], sizes = [8, 64], strides = [1, 1]} : vector<8x256xf32> to vector<8x64xf32>
    %181 = math.tanh %180 : vector<8x64xf32>
    %182 = arith.mulf %178, %168 : vector<8x64xf32>
    %183 = arith.mulf %177, %181 : vector<8x64xf32>
    %184 = arith.addf %182, %183 : vector<8x64xf32>
    %185 = math.tanh %184 : vector<8x64xf32>
    %186 = arith.mulf %179, %185 : vector<8x64xf32>
    %c6_i32_29 = arith.constant 6 : i32
    %c1_i32_30 = arith.constant 1 : i32
    %187 = vector.broadcast %c6_i32_29 : i32 to vector<1x64xi32>
    %188 = vector.broadcast %c1_i32_30 : i32 to vector<1x64xi32>
    %189 = arith.select %10, %187, %188 : vector<1x64xi1>, vector<1x64xi32>
    %190 = vector.broadcast %189 : vector<1x64xi32> to vector<8x64xi32>
    %191 = vector.broadcast %0 : vector<8x1xi32> to vector<8x64xi32>
    %192 = arith.cmpi slt, %190, %191 : vector<8x64xi32>
    %193 = arith.select %192, %186, %167 : vector<8x64xi1>, vector<8x64xf32>
    %194 = arith.select %192, %184, %168 : vector<8x64xi1>, vector<8x64xf32>
    %195 = vector.extract_strided_slice %7 {offsets = [56, 0], sizes = [8, 256], strides = [1, 1]} : vector<64x256xf32> to vector<8x256xf32>
    %cst_31 = arith.constant dense<0.000000e+00> : vector<8x256xf32>
    %196 = tpu.matmul %193, %1, %cst_31 {dimension_numbers = #tpu.dot_dimension_numbers<[1], [0], [0], [1], [0, 0, 1, 1], [], []>} : vector<8x64xf32>, vector<64x256xf32>, vector<8x256xf32> -> vector<8x256xf32>
    %197 = arith.addf %195, %196 : vector<8x256xf32>
    %198 = arith.negf %197 : vector<8x256xf32>
    %199 = math.exp %198 : vector<8x256xf32>
    %cst_32 = arith.constant 1.000000e+00 : f32
    %200 = vector.broadcast %cst_32 : f32 to vector<8x256xf32>
    %201 = arith.addf %200, %199 : vector<8x256xf32>
    %202 = arith.divf %200, %201 : vector<8x256xf32>
    %203 = vector.extract_strided_slice %202 {offsets = [0, 0], sizes = [8, 64], strides = [1, 1]} : vector<8x256xf32> to vector<8x64xf32>
    %204 = vector.extract_strided_slice %202 {offsets = [0, 64], sizes = [8, 64], strides = [1, 1]} : vector<8x256xf32> to vector<8x64xf32>
    %205 = vector.extract_strided_slice %202 {offsets = [0, 192], sizes = [8, 64], strides = [1, 1]} : vector<8x256xf32> to vector<8x64xf32>
    %206 = vector.extract_strided_slice %197 {offsets = [0, 128], sizes = [8, 64], strides = [1, 1]} : vector<8x256xf32> to vector<8x64xf32>
    %207 = math.tanh %206 : vector<8x64xf32>
    %208 = arith.mulf %204, %194 : vector<8x64xf32>
    %209 = arith.mulf %203, %207 : vector<8x64xf32>
    %210 = arith.addf %208, %209 : vector<8x64xf32>
    %211 = math.tanh %210 : vector<8x64xf32>
    %212 = arith.mulf %205, %211 : vector<8x64xf32>
    %c7_i32_33 = arith.constant 7 : i32
    %c0_i32_34 = arith.constant 0 : i32
    %213 = vector.broadcast %c7_i32_33 : i32 to vector<1x64xi32>
    %214 = vector.broadcast %c0_i32_34 : i32 to vector<1x64xi32>
    %215 = arith.select %10, %213, %214 : vector<1x64xi1>, vector<1x64xi32>
    %216 = vector.broadcast %215 : vector<1x64xi32> to vector<8x64xi32>
    %217 = vector.broadcast %0 : vector<8x1xi32> to vector<8x64xi32>
    %218 = arith.cmpi slt, %216, %217 : vector<8x64xi32>
    %219 = arith.select %218, %212, %193 : vector<8x64xi1>, vector<8x64xf32>
    %c0_35 = arith.constant 0 : index
    %c0_36 = arith.constant 0 : index
    %220 = vector.load %arg5[%c0_35, %c0_36] : memref<64x1xf32, #tpu.memory_space<vmem>>, vector<64x1xf32>
    %cst_37 = arith.constant dense<0.000000e+00> : vector<8x1xf32>
    %221 = tpu.matmul %219, %220, %cst_37 {dimension_numbers = #tpu.dot_dimension_numbers<[1], [0], [0], [1], [0, 0, 1, 1], [], []>} : vector<8x64xf32>, vector<64x1xf32>, vector<8x1xf32> -> vector<8x1xf32>
    %c0_38 = arith.constant 0 : index
    %c0_39 = arith.constant 0 : index
    %222 = vector.load %arg6[%c0_38, %c0_39] : memref<1x1xf32, #tpu.memory_space<vmem>>, vector<1x1xf32>
    %223 = vector.broadcast %222 : vector<1x1xf32> to vector<8x1xf32>
    %224 = arith.addf %221, %223 : vector<8x1xf32>
    %225 = arith.negf %224 : vector<8x1xf32>
    %226 = math.exp %225 : vector<8x1xf32>
    %cst_40 = arith.constant 1.000000e+00 : f32
    %227 = vector.broadcast %cst_40 : f32 to vector<8x1xf32>
    %228 = arith.addf %227, %226 : vector<8x1xf32>
    %229 = arith.divf %227, %228 : vector<8x1xf32>
    %c0_41 = arith.constant 0 : index
    %c0_42 = arith.constant 0 : index
    %230 = vector.load %arg7[%c0_41, %c0_42] : memref<8x1xf32, #tpu.memory_space<vmem>>, vector<8x1xf32>
    tpu.vector_store %arg7[%c0_41, %c0_42], %229 {strides = array<i32>} : memref<8x1xf32, #tpu.memory_space<vmem>>, vector<8x1xf32>,
    return
  }
}

</mosaic_0001>

<llo_original>
// kernel: tpu_custom_call.1
$region0: #{tpu_custom_call.1}
  #allocation0 [shape = 'u32[]', space=smem, size = 0x4, offset = 0x4, fixed_abs, tag = 'smem constant byte address 0x4 - core index']
  #allocation1 [shape = 'u32[144,128]{1,0:T(1,128)}', space=vmem, size = 0x12000, scoped, tag = 'internal scratch']
  #allocation2 [shape = 'f32[1,1]{1,0:T(1,128)S(1)}', space=vmem, size = 0x200, scoped, tag = 'scoped memory for tpu_custom_call.1']
  %s0 = inlined_call_operand.vmem [shape: f32[64,32], index: 0, kind: input, shape index: {}]
  %s1 = inlined_call_operand.vmem [shape: s32[8,1], index: 1, kind: input, shape index: {}]
  %s2 = inlined_call_operand.hbm [shape: f32[32,256], index: 2, kind: input, shape index: {}]
  %s3 = inlined_call_operand.vmem [shape: f32[64,256], index: 3, kind: input, shape index: {}]
  %s4 = inlined_call_operand.vmem [shape: f32[1,256], index: 4, kind: input, shape index: {}]
  %s5 = inlined_call_operand.vmem [shape: f32[64,1], index: 5, kind: input, shape index: {}]
  %s6 = inlined_call_operand.<no memory space> [shape: f32[1,1], index: 6, kind: input, shape index: {}]
  %s7 = inlined_call_operand.vmem [shape: f32[8,1], index: 7, kind: output, shape index: {}]
  %s8 = sld [smem:[#allocation0]]
  $region42: #{tpu_custom_call.1} parent=0
    _
  %s10 = ssub.s32 1, %s8
  %s11 = scalar_select 0, %s10, %s8
  %v12 = vstv %s6
  %13 = vst [vmem:[#allocation2] sm:$0x1] %v12
  $region1: #{tpu_custom_call.1} parent=0
    #allocation3 [shape = 'u8[32768]{0}', space=vmem, size = 0x8000, scoped, tag = 'input window, operand 2, single buffered']
    #allocation4 [shape = 's32[1]{0}', space=sflag, size = 0x4, scoped, tag = 'scoped memory for tpu_custom_call.1']
    %14 = vsyncpa [#allocation4], 0
    // Predicated region
    $region2: #{tpu_custom_call.1} parent=1 // pred_check
      _
    $region3: #{tpu_custom_call.1} parent=1 // pred_check_branch
      %16 = sbr.rel (0) target = $region5
    $region4: #{tpu_custom_call.1} parent=1 // pred_region
      _
    $region5: #{tpu_custom_call.1} parent=1 // pred_fallthru
      _
    // Predicated region
    $region6: #{tpu_custom_call.1} parent=1 // pred_check
      _
    $region7: #{tpu_custom_call.1} parent=1 // pred_check_branch
      %18 = sbr.rel (0) target = $region9
    $region8: #{tpu_custom_call.1} parent=1 // pred_region
      _
    $region9: #{tpu_custom_call.1} parent=1 // pred_fallthru
      _
    // Predicated region
    $region10: #{tpu_custom_call.1} parent=1 // pred_check
      _
    $region11: #{tpu_custom_call.1} parent=1 // pred_check_branch
      %20 = sbr.rel (0) target = $region13
    $region12: #{tpu_custom_call.1} parent=1 // pred_region
      %s22 = ssub.s32 1024, 1024
      %23 = vsyncadd [#allocation4], %s22
      %s24 = sshll.u32 [#allocation3], 4
      %s25 = int_to_ptr.vmem [resolvable:$true] %s24
      %30 = dma.hbm_to_vmem [thread:$0]  %s2, 1024, %s25, [#allocation4], 256, 256, 16
    $region13: #{tpu_custom_call.1} parent=1 // pred_fallthru
      _
    // Predicated region
    $region14: #{tpu_custom_call.1} parent=1 // pred_check
      _
    $region15: #{tpu_custom_call.1} parent=1 // pred_check_branch
      %32 = sbr.rel (0) target = $region17
    $region16: #{tpu_custom_call.1} parent=1 // pred_region
      _
    $region17: #{tpu_custom_call.1} parent=1 // pred_fallthru
      _
    // Predicated region
    $region18: #{tpu_custom_call.1} parent=1 // pred_check
      _
    $region19: #{tpu_custom_call.1} parent=1 // pred_check_branch
      %34 = sbr.rel (0) target = $region21
    $region20: #{tpu_custom_call.1} parent=1 // pred_region
      _
    $region21: #{tpu_custom_call.1} parent=1 // pred_fallthru
      _
    // Predicated region
    $region22: #{tpu_custom_call.1} parent=1 // pred_check
      _
    $region23: #{tpu_custom_call.1} parent=1 // pred_check_branch
      %36 = sbr.rel (0) target = $region25
    $region24: #{tpu_custom_call.1} parent=1 // pred_region
      _
    $region25: #{tpu_custom_call.1} parent=1 // pred_fallthru
      _
    // Predicated region
    $region26: #{tpu_custom_call.1} parent=1 // pred_check
      _
    $region27: #{tpu_custom_call.1} parent=1 // pred_check_branch
      %38 = sbr.rel (0) target = $region29
    $region28: #{tpu_custom_call.1} parent=1 // pred_region
      _
    $region29: #{tpu_custom_call.1} parent=1 // pred_fallthru
      _
    // Predicated region
    $region30: #{tpu_custom_call.1} parent=1 // pred_check
      _
    $region31: #{tpu_custom_call.1} parent=1 // pred_check_branch
      %40 = sbr.rel (0) target = $region33
    $region32: #{tpu_custom_call.1} parent=1 // pred_region
      %41 = dma.done [#allocation4], 1024
    $region33: #{tpu_custom_call.1} parent=1 // pred_fallthru
      _
    %v42 = vld [vmem:[%s1] sm:$0xff]
    %v43 = vld [vmem:[%s3] sm:$0xff]
    %v44 = vld [vmem:[%s3 + $0x8] sm:$0xff]
    %v45 = vld [vmem:[%s3 + $0x10] sm:$0xff]
    %v46 = vld [vmem:[%s3 + $0x18] sm:$0xff]
    %v47 = vld [vmem:[%s3 + $0x20] sm:$0xff]
    %v48 = vld [vmem:[%s3 + $0x28] sm:$0xff]
    %v49 = vld [vmem:[%s3 + $0x30] sm:$0xff]
    %v50 = vld [vmem:[%s3 + $0x38] sm:$0xff]
    %v51 = vld [vmem:[%s3 + $0x40] sm:$0xff]
    %v52 = vld [vmem:[%s3 + $0x48] sm:$0xff]
    %v53 = vld [vmem:[%s3 + $0x50] sm:$0xff]
    %v54 = vld [vmem:[%s3 + $0x58] sm:$0xff]
    %v55 = vld [vmem:[%s3 + $0x60] sm:$0xff]
    %v56 = vld [vmem:[%s3 + $0x68] sm:$0xff]
    %v57 = vld [vmem:[%s3 + $0x70] sm:$0xff]
    %v58 = vld [vmem:[%s3 + $0x78] sm:$0xff]
    %v59 = vld [vmem:[%s0] sm:$0xff]
    %v60 = vld [vmem:[%s0 + $0x8] sm:$0xff]
    %v61 = vld [vmem:[%s0 + $0x10] sm:$0xff]
    %v62 = vld [vmem:[%s0 + $0x18] sm:$0xff]
    %v63 = vld [vmem:[%s0 + $0x20] sm:$0xff]
    %v64 = vld [vmem:[%s0 + $0x28] sm:$0xff]
    %v65 = vld [vmem:[%s0 + $0x30] sm:$0xff]
    %v66 = vld [vmem:[%s0 + $0x38] sm:$0xff]
    %v67 = vld [vmem:[#allocation3] sm:$0xff]
    %v68 = vld [vmem:[#allocation3 + $0x8] sm:$0xff]
    %v69 = vld [vmem:[#allocation3 + $0x10] sm:$0xff]
    %v70 = vld [vmem:[#allocation3 + $0x18] sm:$0xff]
    %v71 = vld [vmem:[#allocation3 + $0x20] sm:$0xff]
    %v72 = vld [vmem:[#allocation3 + $0x28] sm:$0xff]
    %v73 = vld [vmem:[#allocation3 + $0x30] sm:$0xff]
    %v74 = vld [vmem:[#allocation3 + $0x38] sm:$0xff]
    %v75 = vld [vmem:[%s4] sm:$0x3]
    %v77 = vlaneseq
    %v78 = vshrl.u32 %v77, 7
    %v79 = vsub.s32 0, %v78
    %v80 = vrot.slane %v75, %v79
    %v81 = vlaneseq
    %v82 = vshrl.u32 %v81, 7
    %v83 = vsub.s32 1, %v82
    %v84 = vrot.slane %v75, %v83
    %vm87 = vcmask 261120
    %v89 = vsel %vm87, %v59, 0
    %v92 = vsel %vm87, %v60, 0
    %v95 = vsel %vm87, %v61, 0
    %v98 = vsel %vm87, %v62, 0
    %v101 = vsel %vm87, %v63, 0
    %v104 = vsel %vm87, %v64, 0
    %v107 = vsel %vm87, %v65, 0
    %v110 = vsel %vm87, %v66, 0
    %112 = vmatprep.subr.mxu0 %v68
    %113 = vmatpush1.msra.mxu0 %v67
    %114 = vmatprep.subr.mxu0 %v70
    %115 = vmatpush1.msra.mxu0 %v69
    %116 = vmatprep.subr.mxu0 %v72
    %117 = vmatpush1.msra.mxu0 %v71
    %118 = vmatprep.subr.mxu0 %v74
    %119 = vmatpush1.msra.mxu0 %v73
    %120 = vmatprep.subr.mxu0 0.0
    %121 = vmatpush1.msra.mxu0 0.0
    %122 = vmatprep.subr.mxu0 0.0
    %123 = vmatpush1.msra.mxu0 0.0
    %124 = vmatprep.subr.mxu0 0.0
    %125 = vmatpush1.msra.mxu0 0.0
    %126 = vmatprep.subr.mxu0 0.0
    %127 = vmatpush1.msra.mxu0 0.0
    %128 = vmatprep.subr.mxu0 0.0
    %129 = vmatpush1.msra.mxu0 0.0
    %130 = vmatprep.subr.mxu0 0.0
    %131 = vmatpush1.msra.mxu0 0.0
    %132 = vmatprep.subr.mxu0 0.0
    %133 = vmatpush1.msra.mxu0 0.0
    %134 = vmatprep.subr.mxu0 0.0
    %135 = vmatpush1.msra.mxu0 0.0
    %136 = vmatprep.subr.mxu0 0.0
    %137 = vmatpush1.msra.mxu0 0.0
    %138 = vmatprep.subr.mxu0 0.0
    %139 = vmatpush1.msra.mxu0 0.0
    %140 = vmatprep.subr.mxu0 0.0
    %141 = vmatpush1.msra.mxu0 0.0
    %142 = vmatprep.subr.mxu0 0.0
    %143 = vmatpush1.msra.mxu0 0.0
    %144 = vmatprep.subr.mxu0 0.0
    %145 = vmatpush1.msra.mxu0 0.0
    %146 = vmatprep.subr.mxu0 0.0
    %147 = vmatpush1.msra.mxu0 0.0
    %148 = vmatprep.subr.mxu0 0.0
    %149 = vmatpush1.msra.mxu0 0.0
    %150 = vmatprep.subr.mxu0 0.0
    %151 = vmatpush1.msra.mxu0 0.0
    %152 = vmatprep.subr.mxu0 0.0
    %153 = vmatpush1.msra.mxu0 0.0
    %154 = vmatprep.subr.mxu0 0.0
    %155 = vmatpush1.msra.mxu0 0.0
    %156 = vmatprep.subr.mxu0 0.0
    %157 = vmatpush1.msra.mxu0 0.0
    %158 = vmatprep.subr.mxu0 0.0
    %159 = vmatpush1.msra.mxu0 0.0
    %160 = vmatprep.subr.mxu0 0.0
    %161 = vmatpush1.msra.mxu0 0.0
    %162 = vmatprep.subr.mxu0 0.0
    %163 = vmatpush1.msra.mxu0 0.0
    %164 = vmatprep.subr.mxu0 0.0
    %165 = vmatpush1.msra.mxu0 0.0
    %166 = vmatprep.subr.mxu0 0.0
    %167 = vmatpush1.msra.mxu0 0.0
    %168 = vmatprep.subr.mxu0 0.0
    %169 = vmatpush1.msra.mxu0 0.0
    %170 = vmatprep.subr.mxu0 0.0
    %171 = vmatpush1.msra.mxu0 0.0
    %172 = vmatprep.subr.mxu0 0.0
    %173 = vmatpush1.msra.mxu0 0.0
    %174 = vmatprep.subr.mxu0 0.0
    %175 = vmatpush1.msra.mxu0 0.0
    %176 = vmatprep.mubr.f32.mxu0 0.0
    %177 = vmatmul.mubr.f32.gmra.mrb[0].mxu0 %v89
    %v178 = vpop.f32.mrb[0].mxu0
    %v179 = vadd.f32 %v80, %v178
    %v180 = vpop.f32.mrb[0].mxu0
    %v181 = vadd.f32 %v84, %v180
    %182 = vmatprep.mubr.f32.mxu0 0.0
    %183 = vmatmul.mubr.f32.gmra.mrb[0].mxu0 %v92
    %v184 = vpop.f32.mrb[0].mxu0
    %v185 = vadd.f32 %v80, %v184
    %v186 = vpop.f32.mrb[0].mxu0
    %v187 = vadd.f32 %v84, %v186
    %188 = vmatprep.mubr.f32.mxu0 0.0
    %189 = vmatmul.mubr.f32.gmra.mrb[0].mxu0 %v95
    %v190 = vpop.f32.mrb[0].mxu0
    %v191 = vadd.f32 %v80, %v190
    %v192 = vpop.f32.mrb[0].mxu0
    %v193 = vadd.f32 %v84, %v192
    %194 = vmatprep.mubr.f32.mxu0 0.0
    %195 = vmatmul.mubr.f32.gmra.mrb[0].mxu0 %v98
    %v196 = vpop.f32.mrb[0].mxu0
    %v197 = vadd.f32 %v80, %v196
    %v198 = vpop.f32.mrb[0].mxu0
    %v199 = vadd.f32 %v84, %v198
    %200 = vmatprep.mubr.f32.mxu0 0.0
    %201 = vmatmul.mubr.f32.gmra.mrb[0].mxu0 %v101
    %v202 = vpop.f32.mrb[0].mxu0
    %v203 = vadd.f32 %v80, %v202
    %v204 = vpop.f32.mrb[0].mxu0
    %v205 = vadd.f32 %v84, %v204
    %206 = vmatprep.mubr.f32.mxu0 0.0
    %207 = vmatmul.mubr.f32.gmra.mrb[0].mxu0 %v104
    %v208 = vpop.f32.mrb[0].mxu0
    %v209 = vadd.f32 %v80, %v208
    %v210 = vpop.f32.mrb[0].mxu0
    %v211 = vadd.f32 %v84, %v210
    %212 = vmatprep.mubr.f32.mxu0 0.0
    %213 = vmatmul.mubr.f32.gmra.mrb[0].mxu0 %v107
    %v214 = vpop.f32.mrb[0].mxu0
    %v215 = vadd.f32 %v80, %v214
    %v216 = vpop.f32.mrb[0].mxu0
    %v217 = vadd.f32 %v84, %v216
    %218 = vmatprep.mubr.f32.mxu0 0.0
    %219 = vmatmul.mubr.f32.gmra.mrb[0].mxu0 %v110
    %v220 = vpop.f32.mrb[0].mxu0
    %v221 = vadd.f32 %v80, %v220
    %v222 = vpop.f32.mrb[0].mxu0
    %v223 = vadd.f32 %v84, %v222
    %224 = vdwg.mxu0
    %v225 = vlaneseq
    %v226 = vand.u32 %v225, 127
    %vm227 = vcmp.lt.s32.totalorder %v226, 32
    %vm228 = vcmask 523264
    %v230 = vsel %vm228, 0.0, 0
    %232 = vmatprep.subr.mxu0 %v44
    %233 = vmatpush1.msra.mxu0 %v43
    %234 = vmatprep.subr.mxu0 %v46
    %235 = vmatpush1.msra.mxu0 %v45
    %236 = vmatprep.subr.mxu0 %v48
    %237 = vmatpush1.msra.mxu0 %v47
    %238 = vmatprep.subr.mxu0 %v50
    %239 = vmatpush1.msra.mxu0 %v49
    %240 = vmatprep.subr.mxu0 %v52
    %241 = vmatpush1.msra.mxu0 %v51
    %242 = vmatprep.subr.mxu0 %v54
    %243 = vmatpush1.msra.mxu0 %v53
    %244 = vmatprep.subr.mxu0 %v56
    %245 = vmatpush1.msra.mxu0 %v55
    %246 = vmatprep.subr.mxu0 %v58
    %247 = vmatpush1.msra.mxu0 %v57
    %248 = vmatprep.subr.mxu0 0.0
    %249 = vmatpush1.msra.mxu0 0.0
    %250 = vmatprep.subr.mxu0 0.0
    %251 = vmatpush1.msra.mxu0 0.0
    %252 = vmatprep.subr.mxu0 0.0
    %253 = vmatpush1.msra.mxu0 0.0
    %254 = vmatprep.subr.mxu0 0.0
    %255 = vmatpush1.msra.mxu0 0.0
    %256 = vmatprep.subr.mxu0 0.0
    %257 = vmatpush1.msra.mxu0 0.0
    %258 = vmatprep.subr.mxu0 0.0
    %259 = vmatpush1.msra.mxu0 0.0
    %260 = vmatprep.subr.mxu0 0.0
    %261 = vmatpush1.msra.mxu0 0.0
    %262 = vmatprep.subr.mxu0 0.0
    %263 = vmatpush1.msra.mxu0 0.0
    %264 = vmatprep.subr.mxu0 0.0
    %265 = vmatpush1.msra.mxu0 0.0
    %266 = vmatprep.subr.mxu0 0.0
    %267 = vmatpush1.msra.mxu0 0.0
    %268 = vmatprep.subr.mxu0 0.0
    %269 = vmatpush1.msra.mxu0 0.0
    %270 = vmatprep.subr.mxu0 0.0
    %271 = vmatpush1.msra.mxu0 0.0
    %272 = vmatprep.subr.mxu0 0.0
    %273 = vmatpush1.msra.mxu0 0.0
    %274 = vmatprep.subr.mxu0 0.0
    %275 = vmatpush1.msra.mxu0 0.0
    %276 = vmatprep.subr.mxu0 0.0
    %277 = vmatpush1.msra.mxu0 0.0
    %278 = vmatprep.subr.mxu0 0.0
    %279 = vmatpush1.msra.mxu0 0.0
    %280 = vmatprep.subr.mxu0 0.0
    %281 = vmatpush1.msra.mxu0 0.0
    %282 = vmatprep.subr.mxu0 0.0
    %283 = vmatpush1.msra.mxu0 0.0
    %284 = vmatprep.subr.mxu0 0.0
    %285 = vmatpush1.msra.mxu0 0.0
    %286 = vmatprep.subr.mxu0 0.0
    %287 = vmatpush1.msra.mxu0 0.0
    %288 = vmatprep.subr.mxu0 0.0
    %289 = vmatpush1.msra.mxu0 0.0
    %290 = vmatprep.subr.mxu0 0.0
    %291 = vmatpush1.msra.mxu0 0.0
    %292 = vmatprep.subr.mxu0 0.0
    %293 = vmatpush1.msra.mxu0 0.0
    %294 = vmatprep.subr.mxu0 0.0
    %295 = vmatpush1.msra.mxu0 0.0
    %296 = vmatprep.mubr.f32.mxu0 0.0
    %297 = vmatmul.mubr.f32.gmra.mrb[0].mxu0 %v230
    %v298 = vpop.f32.mrb[0].mxu0
    %v299 = vadd.f32 0.0, %v298
    %v300 = vpop.f32.mrb[0].mxu0
    %v301 = vadd.f32 0.0, %v300
    %302 = vdwg.mxu0
    %v303 = vadd.f32 %v179, %v299
    %v304 = vadd.f32 %v181, %v301
    %v305 = vxor.u32 %v303, 2147483648
    %v306 = vxor.u32 %v304, 2147483648
    %v307 = vmul.f32 %v305, 1.442695
    %v308 = vpow.pop %v307
    %v309 = vmul.f32 %v306, 1.442695
    %v310 = vpow.pop %v309
    %v311 = vadd.f32 %v308, 1.0
    %v312 = vadd.f32 %v310, 1.0
    %v313 = vrcp.pop %v311
    %v314 = vmul.f32 1.0, %v313
    %v315 = vrcp.pop %v312
    %v316 = vmul.f32 1.0, %v315
    %v317 = vtanh.pop %v304
    %v318 = vmul.f32 %v314, 0.0
    %v319 = vmul.f32 %v314, %v317
    %321 = vrot.lane.b32.xlu0 %v319, 64
    %v322 = vpop.permute.xlu0 %321
    %v324 = vadd.f32 %v318, %v322
    %v325 = vtanh.pop %v324
    %v326 = vmul.f32 %v316, %v325
    %v327 = vsel %vm227, 0, 7
    %328 = vset.pattern.permute.xlu0 0
    %329 = vperm.xlu0 %328, %v42
    %v330 = vpop.permute.xlu0 %329
    %vm331 = vcmp.lt.s32.totalorder %v327, %v330
    %333 = vrot.lane.b32.xlu0 %v326, 64
    %v334 = vpop.permute.xlu0 %333
    %v336 = vsel %vm331, %v334, 0.0
    %338 = vrot.lane.b32.xlu0 %v324, 64
    %v339 = vpop.permute.xlu0 %338
    %v341 = vsel %vm331, %v339, 0.0
    %v343 = vsel %vm228, %v336, 0
    %345 = vmatprep.subr.mxu0 %v44
    %346 = vmatpush1.msra.mxu0 %v43
    %347 = vmatprep.subr.mxu0 %v46
    %348 = vmatpush1.msra.mxu0 %v45
    %349 = vmatprep.subr.mxu0 %v48
    %350 = vmatpush1.msra.mxu0 %v47
    %351 = vmatprep.subr.mxu0 %v50
    %352 = vmatpush1.msra.mxu0 %v49
    %353 = vmatprep.subr.mxu0 %v52
    %354 = vmatpush1.msra.mxu0 %v51
    %355 = vmatprep.subr.mxu0 %v54
    %356 = vmatpush1.msra.mxu0 %v53
    %357 = vmatprep.subr.mxu0 %v56
    %358 = vmatpush1.msra.mxu0 %v55
    %359 = vmatprep.subr.mxu0 %v58
    %360 = vmatpush1.msra.mxu0 %v57
    %361 = vmatprep.subr.mxu0 0.0
    %362 = vmatpush1.msra.mxu0 0.0
    %363 = vmatprep.subr.mxu0 0.0
    %364 = vmatpush1.msra.mxu0 0.0
    %365 = vmatprep.subr.mxu0 0.0
    %366 = vmatpush1.msra.mxu0 0.0
    %367 = vmatprep.subr.mxu0 0.0
    %368 = vmatpush1.msra.mxu0 0.0
    %369 = vmatprep.subr.mxu0 0.0
    %370 = vmatpush1.msra.mxu0 0.0
    %371 = vmatprep.subr.mxu0 0.0
    %372 = vmatpush1.msra.mxu0 0.0
    %373 = vmatprep.subr.mxu0 0.0
    %374 = vmatpush1.msra.mxu0 0.0
    %375 = vmatprep.subr.mxu0 0.0
    %376 = vmatpush1.msra.mxu0 0.0
    %377 = vmatprep.subr.mxu0 0.0
    %378 = vmatpush1.msra.mxu0 0.0
    %379 = vmatprep.subr.mxu0 0.0
    %380 = vmatpush1.msra.mxu0 0.0
    %381 = vmatprep.subr.mxu0 0.0
    %382 = vmatpush1.msra.mxu0 0.0
    %383 = vmatprep.subr.mxu0 0.0
    %384 = vmatpush1.msra.mxu0 0.0
    %385 = vmatprep.subr.mxu0 0.0
    %386 = vmatpush1.msra.mxu0 0.0
    %387 = vmatprep.subr.mxu0 0.0
    %388 = vmatpush1.msra.mxu0 0.0
    %389 = vmatprep.subr.mxu0 0.0
    %390 = vmatpush1.msra.mxu0 0.0
    %391 = vmatprep.subr.mxu0 0.0
    %392 = vmatpush1.msra.mxu0 0.0
    %393 = vmatprep.subr.mxu0 0.0
    %394 = vmatpush1.msra.mxu0 0.0
    %395 = vmatprep.subr.mxu0 0.0
    %396 = vmatpush1.msra.mxu0 0.0
    %397 = vmatprep.subr.mxu0 0.0
    %398 = vmatpush1.msra.mxu0 0.0
    %399 = vmatprep.subr.mxu0 0.0
    %400 = vmatpush1.msra.mxu0 0.0
    %401 = vmatprep.subr.mxu0 0.0
    %402 = vmatpush1.msra.mxu0 0.0
    %403 = vmatprep.subr.mxu0 0.0
    %404 = vmatpush1.msra.mxu0 0.0
    %405 = vmatprep.subr.mxu0 0.0
    %406 = vmatpush1.msra.mxu0 0.0
    %407 = vmatprep.subr.mxu0 0.0
    %408 = vmatpush1.msra.mxu0 0.0
    %409 = vmatprep.mubr.f32.mxu0 0.0
    %410 = vmatmul.mubr.f32.gmra.mrb[0].mxu0 %v343
    %v411 = vpop.f32.mrb[0].mxu0
    %v412 = vadd.f32 0.0, %v411
    %v413 = vpop.f32.mrb[0].mxu0
    %v414 = vadd.f32 0.0, %v413
    %415 = vdwg.mxu0
    %v416 = vadd.f32 %v185, %v412
    %v417 = vadd.f32 %v187, %v414
    %v418 = vxor.u32 %v416, 2147483648
    %v419 = vxor.u32 %v417, 2147483648
    %v420 = vmul.f32 %v418, 1.442695
    %v421 = vpow.pop %v420
    %v422 = vmul.f32 %v419, 1.442695
    %v423 = vpow.pop %v422
    %v424 = vadd.f32 %v421, 1.0
    %v425 = vadd.f32 %v423, 1.0
    %v426 = vrcp.pop %v424
    %v427 = vmul.f32 1.0, %v426
    %v428 = vrcp.pop %v425
    %v429 = vmul.f32 1.0, %v428
    %v430 = vtanh.pop %v417
    %432 = vrot.lane.b32.xlu0 %v341, 64
    %v433 = vpop.permute.xlu0 %432
    %v435 = vmul.f32 %v427, %v433
    %v436 = vmul.f32 %v427, %v430
    %438 = vrot.lane.b32.xlu0 %v436, 64
    %v439 = vpop.permute.xlu0 %438
    %v441 = vadd.f32 %v435, %v439
    %v442 = vtanh.pop %v441
    %v443 = vmul.f32 %v429, %v442
    %v444 = vsel %vm227, 1, 6
    %vm445 = vcmp.lt.s32.totalorder %v444, %v330
    %447 = vrot.lane.b32.xlu0 %v443, 64
    %v448 = vpop.permute.xlu0 %447
    %v450 = vsel %vm445, %v448, %v336
    %452 = vrot.lane.b32.xlu0 %v441, 64
    %v453 = vpop.permute.xlu0 %452
    %v455 = vsel %vm445, %v453, %v341
    %v457 = vsel %vm228, %v450, 0
    %459 = vmatprep.subr.mxu0 %v44
    %460 = vmatpush1.msra.mxu0 %v43
    %461 = vmatprep.subr.mxu0 %v46
    %462 = vmatpush1.msra.mxu0 %v45
    %463 = vmatprep.subr.mxu0 %v48
    %464 = vmatpush1.msra.mxu0 %v47
    %465 = vmatprep.subr.mxu0 %v50
    %466 = vmatpush1.msra.mxu0 %v49
    %467 = vmatprep.subr.mxu0 %v52
    %468 = vmatpush1.msra.mxu0 %v51
    %469 = vmatprep.subr.mxu0 %v54
    %470 = vmatpush1.msra.mxu0 %v53
    %471 = vmatprep.subr.mxu0 %v56
    %472 = vmatpush1.msra.mxu0 %v55
    %473 = vmatprep.subr.mxu0 %v58
    %474 = vmatpush1.msra.mxu0 %v57
    %475 = vmatprep.subr.mxu0 0.0
    %476 = vmatpush1.msra.mxu0 0.0
    %477 = vmatprep.subr.mxu0 0.0
    %478 = vmatpush1.msra.mxu0 0.0
    %479 = vmatprep.subr.mxu0 0.0
    %480 = vmatpush1.msra.mxu0 0.0
    %481 = vmatprep.subr.mxu0 0.0
    %482 = vmatpush1.msra.mxu0 0.0
    %483 = vmatprep.subr.mxu0 0.0
    %484 = vmatpush1.msra.mxu0 0.0
    %485 = vmatprep.subr.mxu0 0.0
    %486 = vmatpush1.msra.mxu0 0.0
    %487 = vmatprep.subr.mxu0 0.0
    %488 = vmatpush1.msra.mxu0 0.0
    %489 = vmatprep.subr.mxu0 0.0
    %490 = vmatpush1.msra.mxu0 0.0
    %491 = vmatprep.subr.mxu0 0.0
    %492 = vmatpush1.msra.mxu0 0.0
    %493 = vmatprep.subr.mxu0 0.0
    %494 = vmatpush1.msra.mxu0 0.0
    %495 = vmatprep.subr.mxu0 0.0
    %496 = vmatpush1.msra.mxu0 0.0
    %497 = vmatprep.subr.mxu0 0.0
    %498 = vmatpush1.msra.mxu0 0.0
    %499 = vmatprep.subr.mxu0 0.0
    %500 = vmatpush1.msra.mxu0 0.0
    %501 = vmatprep.subr.mxu0 0.0
    %502 = vmatpush1.msra.mxu0 0.0
    %503 = vmatprep.subr.mxu0 0.0
    %504 = vmatpush1.msra.mxu0 0.0
    %505 = vmatprep.subr.mxu0 0.0
    %506 = vmatpush1.msra.mxu0 0.0
    %507 = vmatprep.subr.mxu0 0.0
    %508 = vmatpush1.msra.mxu0 0.0
    %509 = vmatprep.subr.mxu0 0.0
    %510 = vmatpush1.msra.mxu0 0.0
    %511 = vmatprep.subr.mxu0 0.0
    %512 = vmatpush1.msra.mxu0 0.0
    %513 = vmatprep.subr.mxu0 0.0
    %514 = vmatpush1.msra.mxu0 0.0
    %515 = vmatprep.subr.mxu0 0.0
    %516 = vmatpush1.msra.mxu0 0.0
    %517 = vmatprep.subr.mxu0 0.0
    %518 = vmatpush1.msra.mxu0 0.0
    %519 = vmatprep.subr.mxu0 0.0
    %520 = vmatpush1.msra.mxu0 0.0
    %521 = vmatprep.subr.mxu0 0.0
    %522 = vmatpush1.msra.mxu0 0.0
    %523 = vmatprep.mubr.f32.mxu0 0.0
    %524 = vmatmul.mubr.f32.gmra.mrb[0].mxu0 %v457
    %v525 = vpop.f32.mrb[0].mxu0
    %v526 = vadd.f32 0.0, %v525
    %v527 = vpop.f32.mrb[0].mxu0
    %v528 = vadd.f32 0.0, %v527
    %529 = vdwg.mxu0
    %v530 = vadd.f32 %v191, %v526
    %v531 = vadd.f32 %v193, %v528
    %v532 = vxor.u32 %v530, 2147483648
    %v533 = vxor.u32 %v531, 2147483648
    %v534 = vmul.f32 %v532, 1.442695
    %v535 = vpow.pop %v534
    %v536 = vmul.f32 %v533, 1.442695
    %v537 = vpow.pop %v536
    %v538 = vadd.f32 %v535, 1.0
    %v539 = vadd.f32 %v537, 1.0
    %v540 = vrcp.pop %v538
    %v541 = vmul.f32 1.0, %v540
    %v542 = vrcp.pop %v539
    %v543 = vmul.f32 1.0, %v542
    %v544 = vtanh.pop %v531
    %546 = vrot.lane.b32.xlu0 %v455, 64
    %v547 = vpop.permute.xlu0 %546
    %v549 = vmul.f32 %v541, %v547
    %v550 = vmul.f32 %v541, %v544
    %552 = vrot.lane.b32.xlu0 %v550, 64
    %v553 = vpop.permute.xlu0 %552
    %v555 = vadd.f32 %v549, %v553
    %v556 = vtanh.pop %v555
    %v557 = vmul.f32 %v543, %v556
    %v558 = vsel %vm227, 2, 5
    %vm559 = vcmp.lt.s32.totalorder %v558, %v330
    %561 = vrot.lane.b32.xlu0 %v557, 64
    %v562 = vpop.permute.xlu0 %561
    %v564 = vsel %vm559, %v562, %v450
    %566 = vrot.lane.b32.xlu0 %v555, 64
    %v567 = vpop.permute.xlu0 %566
    %v569 = vsel %vm559, %v567, %v455
    %v571 = vsel %vm228, %v564, 0
    %573 = vmatprep.subr.mxu0 %v44
    %574 = vmatpush1.msra.mxu0 %v43
    %575 = vmatprep.subr.mxu0 %v46
    %576 = vmatpush1.msra.mxu0 %v45
    %577 = vmatprep.subr.mxu0 %v48
    %578 = vmatpush1.msra.mxu0 %v47
    %579 = vmatprep.subr.mxu0 %v50
    %580 = vmatpush1.msra.mxu0 %v49
    %581 = vmatprep.subr.mxu0 %v52
    %582 = vmatpush1.msra.mxu0 %v51
    %583 = vmatprep.subr.mxu0 %v54
    %584 = vmatpush1.msra.mxu0 %v53
    %585 = vmatprep.subr.mxu0 %v56
    %586 = vmatpush1.msra.mxu0 %v55
    %587 = vmatprep.subr.mxu0 %v58
    %588 = vmatpush1.msra.mxu0 %v57
    %589 = vmatprep.subr.mxu0 0.0
    %590 = vmatpush1.msra.mxu0 0.0
    %591 = vmatprep.subr.mxu0 0.0
    %592 = vmatpush1.msra.mxu0 0.0
    %593 = vmatprep.subr.mxu0 0.0
    %594 = vmatpush1.msra.mxu0 0.0
    %595 = vmatprep.subr.mxu0 0.0
    %596 = vmatpush1.msra.mxu0 0.0
    %597 = vmatprep.subr.mxu0 0.0
    %598 = vmatpush1.msra.mxu0 0.0
    %599 = vmatprep.subr.mxu0 0.0
    %600 = vmatpush1.msra.mxu0 0.0
    %601 = vmatprep.subr.mxu0 0.0
    %602 = vmatpush1.msra.mxu0 0.0
    %603 = vmatprep.subr.mxu0 0.0
    %604 = vmatpush1.msra.mxu0 0.0
    %605 = vmatprep.subr.mxu0 0.0
    %606 = vmatpush1.msra.mxu0 0.0
    %607 = vmatprep.subr.mxu0 0.0
    %608 = vmatpush1.msra.mxu0 0.0
    %609 = vmatprep.subr.mxu0 0.0
    %610 = vmatpush1.msra.mxu0 0.0
    %611 = vmatprep.subr.mxu0 0.0
    %612 = vmatpush1.msra.mxu0 0.0
    %613 = vmatprep.subr.mxu0 0.0
    %614 = vmatpush1.msra.mxu0 0.0
    %615 = vmatprep.subr.mxu0 0.0
    %616 = vmatpush1.msra.mxu0 0.0
    %617 = vmatprep.subr.mxu0 0.0
    %618 = vmatpush1.msra.mxu0 0.0
    %619 = vmatprep.subr.mxu0 0.0
    %620 = vmatpush1.msra.mxu0 0.0
    %621 = vmatprep.subr.mxu0 0.0
    %622 = vmatpush1.msra.mxu0 0.0
    %623 = vmatprep.subr.mxu0 0.0
    %624 = vmatpush1.msra.mxu0 0.0
    %625 = vmatprep.subr.mxu0 0.0
    %626 = vmatpush1.msra.mxu0 0.0
    %627 = vmatprep.subr.mxu0 0.0
    %628 = vmatpush1.msra.mxu0 0.0
    %629 = vmatprep.subr.mxu0 0.0
    %630 = vmatpush1.msra.mxu0 0.0
    %631 = vmatprep.subr.mxu0 0.0
    %632 = vmatpush1.msra.mxu0 0.0
    %633 = vmatprep.subr.mxu0 0.0
    %634 = vmatpush1.msra.mxu0 0.0
    %635 = vmatprep.subr.mxu0 0.0
    %636 = vmatpush1.msra.mxu0 0.0
    %637 = vmatprep.mubr.f32.mxu0 0.0
    %638 = vmatmul.mubr.f32.gmra.mrb[0].mxu0 %v571
    %v639 = vpop.f32.mrb[0].mxu0
    %v640 = vadd.f32 0.0, %v639
    %v641 = vpop.f32.mrb[0].mxu0
    %v642 = vadd.f32 0.0, %v641
    %643 = vdwg.mxu0
    %v644 = vadd.f32 %v197, %v640
    %v645 = vadd.f32 %v199, %v642
    %v646 = vxor.u32 %v644, 2147483648
    %v647 = vxor.u32 %v645, 2147483648
    %v648 = vmul.f32 %v646, 1.442695
    %v649 = vpow.pop %v648
    %v650 = vmul.f32 %v647, 1.442695
    %v651 = vpow.pop %v650
    %v652 = vadd.f32 %v649, 1.0
    %v653 = vadd.f32 %v651, 1.0
    %v654 = vrcp.pop %v652
    %v655 = vmul.f32 1.0, %v654
    %v656 = vrcp.pop %v653
    %v657 = vmul.f32 1.0, %v656
    %v658 = vtanh.pop %v645
    %660 = vrot.lane.b32.xlu0 %v569, 64
    %v661 = vpop.permute.xlu0 %660
    %v663 = vmul.f32 %v655, %v661
    %v664 = vmul.f32 %v655, %v658
    %666 = vrot.lane.b32.xlu0 %v664, 64
    %v667 = vpop.permute.xlu0 %666
    %v669 = vadd.f32 %v663, %v667
    %v670 = vtanh.pop %v669
    %v671 = vmul.f32 %v657, %v670
    %v672 = vsel %vm227, 3, 4
    %vm673 = vcmp.lt.s32.totalorder %v672, %v330
    %675 = vrot.lane.b32.xlu0 %v671, 64
    %v676 = vpop.permute.xlu0 %675
    %v678 = vsel %vm673, %v676, %v564
    %680 = vrot.lane.b32.xlu0 %v669, 64
    %v681 = vpop.permute.xlu0 %680
    %v683 = vsel %vm673, %v681, %v569
    %v685 = vsel %vm228, %v678, 0
    %687 = vmatprep.subr.mxu0 %v44
    %688 = vmatpush1.msra.mxu0 %v43
    %689 = vmatprep.subr.mxu0 %v46
    %690 = vmatpush1.msra.mxu0 %v45
    %691 = vmatprep.subr.mxu0 %v48
    %692 = vmatpush1.msra.mxu0 %v47
    %693 = vmatprep.subr.mxu0 %v50
    %694 = vmatpush1.msra.mxu0 %v49
    %695 = vmatprep.subr.mxu0 %v52
    %696 = vmatpush1.msra.mxu0 %v51
    %697 = vmatprep.subr.mxu0 %v54
    %698 = vmatpush1.msra.mxu0 %v53
    %699 = vmatprep.subr.mxu0 %v56
    %700 = vmatpush1.msra.mxu0 %v55
    %701 = vmatprep.subr.mxu0 %v58
    %702 = vmatpush1.msra.mxu0 %v57
    %703 = vmatprep.subr.mxu0 0.0
    %704 = vmatpush1.msra.mxu0 0.0
    %705 = vmatprep.subr.mxu0 0.0
    %706 = vmatpush1.msra.mxu0 0.0
    %707 = vmatprep.subr.mxu0 0.0
    %708 = vmatpush1.msra.mxu0 0.0
    %709 = vmatprep.subr.mxu0 0.0
    %710 = vmatpush1.msra.mxu0 0.0
    %711 = vmatprep.subr.mxu0 0.0
    %712 = vmatpush1.msra.mxu0 0.0
    %713 = vmatprep.subr.mxu0 0.0
    %714 = vmatpush1.msra.mxu0 0.0
    %715 = vmatprep.subr.mxu0 0.0
    %716 = vmatpush1.msra.mxu0 0.0
    %717 = vmatprep.subr.mxu0 0.0
    %718 = vmatpush1.msra.mxu0 0.0
    %719 = vmatprep.subr.mxu0 0.0
    %720 = vmatpush1.msra.mxu0 0.0
    %721 = vmatprep.subr.mxu0 0.0
    %722 = vmatpush1.msra.mxu0 0.0
    %723 = vmatprep.subr.mxu0 0.0
    %724 = vmatpush1.msra.mxu0 0.0
    %725 = vmatprep.subr.mxu0 0.0
    %726 = vmatpush1.msra.mxu0 0.0
    %727 = vmatprep.subr.mxu0 0.0
    %728 = vmatpush1.msra.mxu0 0.0
    %729 = vmatprep.subr.mxu0 0.0
    %730 = vmatpush1.msra.mxu0 0.0
    %731 = vmatprep.subr.mxu0 0.0
    %732 = vmatpush1.msra.mxu0 0.0
    %733 = vmatprep.subr.mxu0 0.0
    %734 = vmatpush1.msra.mxu0 0.0
    %735 = vmatprep.subr.mxu0 0.0
    %736 = vmatpush1.msra.mxu0 0.0
    %737 = vmatprep.subr.mxu0 0.0
    %738 = vmatpush1.msra.mxu0 0.0
    %739 = vmatprep.subr.mxu0 0.0
    %740 = vmatpush1.msra.mxu0 0.0
    %741 = vmatprep.subr.mxu0 0.0
    %742 = vmatpush1.msra.mxu0 0.0
    %743 = vmatprep.subr.mxu0 0.0
    %744 = vmatpush1.msra.mxu0 0.0
    %745 = vmatprep.subr.mxu0 0.0
    %746 = vmatpush1.msra.mxu0 0.0
    %747 = vmatprep.subr.mxu0 0.0
    %748 = vmatpush1.msra.mxu0 0.0
    %749 = vmatprep.subr.mxu0 0.0
    %750 = vmatpush1.msra.mxu0 0.0
    %751 = vmatprep.mubr.f32.mxu0 0.0
    %752 = vmatmul.mubr.f32.gmra.mrb[0].mxu0 %v685
    %v753 = vpop.f32.mrb[0].mxu0
    %v754 = vadd.f32 0.0, %v753
    %v755 = vpop.f32.mrb[0].mxu0
    %v756 = vadd.f32 0.0, %v755
    %757 = vdwg.mxu0
    %v758 = vadd.f32 %v203, %v754
    %v759 = vadd.f32 %v205, %v756
    %v760 = vxor.u32 %v758, 2147483648
    %v761 = vxor.u32 %v759, 2147483648
    %v762 = vmul.f32 %v760, 1.442695
    %v763 = vpow.pop %v762
    %v764 = vmul.f32 %v761, 1.442695
    %v765 = vpow.pop %v764
    %v766 = vadd.f32 %v763, 1.0
    %v767 = vadd.f32 %v765, 1.0
    %v768 = vrcp.pop %v766
    %v769 = vmul.f32 1.0, %v768
    %v770 = vrcp.pop %v767
    %v771 = vmul.f32 1.0, %v770
    %v772 = vtanh.pop %v759
    %774 = vrot.lane.b32.xlu0 %v683, 64
    %v775 = vpop.permute.xlu0 %774
    %v777 = vmul.f32 %v769, %v775
    %v778 = vmul.f32 %v769, %v772
    %780 = vrot.lane.b32.xlu0 %v778, 64
    %v781 = vpop.permute.xlu0 %780
    %v783 = vadd.f32 %v777, %v781
    %v784 = vtanh.pop %v783
    %v785 = vmul.f32 %v771, %v784
    %v786 = vsel %vm227, 4, 3
    %vm787 = vcmp.lt.s32.totalorder %v786, %v330
    %789 = vrot.lane.b32.xlu0 %v785, 64
    %v790 = vpop.permute.xlu0 %789
    %v792 = vsel %vm787, %v790, %v678
    %794 = vrot.lane.b32.xlu0 %v783, 64
    %v795 = vpop.permute.xlu0 %794
    %v797 = vsel %vm787, %v795, %v683
    %v799 = vsel %vm228, %v792, 0
    %801 = vmatprep.subr.mxu0 %v44
    %802 = vmatpush1.msra.mxu0 %v43
    %803 = vmatprep.subr.mxu0 %v46
    %804 = vmatpush1.msra.mxu0 %v45
    %805 = vmatprep.subr.mxu0 %v48
    %806 = vmatpush1.msra.mxu0 %v47
    %807 = vmatprep.subr.mxu0 %v50
    %808 = vmatpush1.msra.mxu0 %v49
    %809 = vmatprep.subr.mxu0 %v52
    %810 = vmatpush1.msra.mxu0 %v51
    %811 = vmatprep.subr.mxu0 %v54
    %812 = vmatpush1.msra.mxu0 %v53
    %813 = vmatprep.subr.mxu0 %v56
    %814 = vmatpush1.msra.mxu0 %v55
    %815 = vmatprep.subr.mxu0 %v58
    %816 = vmatpush1.msra.mxu0 %v57
    %817 = vmatprep.subr.mxu0 0.0
    %818 = vmatpush1.msra.mxu0 0.0
    %819 = vmatprep.subr.mxu0 0.0
    %820 = vmatpush1.msra.mxu0 0.0
    %821 = vmatprep.subr.mxu0 0.0
    %822 = vmatpush1.msra.mxu0 0.0
    %823 = vmatprep.subr.mxu0 0.0
    %824 = vmatpush1.msra.mxu0 0.0
    %825 = vmatprep.subr.mxu0 0.0
    %826 = vmatpush1.msra.mxu0 0.0
    %827 = vmatprep.subr.mxu0 0.0
    %828 = vmatpush1.msra.mxu0 0.0
    %829 = vmatprep.subr.mxu0 0.0
    %830 = vmatpush1.msra.mxu0 0.0
    %831 = vmatprep.subr.mxu0 0.0
    %832 = vmatpush1.msra.mxu0 0.0
    %833 = vmatprep.subr.mxu0 0.0
    %834 = vmatpush1.msra.mxu0 0.0
    %835 = vmatprep.subr.mxu0 0.0
    %836 = vmatpush1.msra.mxu0 0.0
    %837 = vmatprep.subr.mxu0 0.0
    %838 = vmatpush1.msra.mxu0 0.0
    %839 = vmatprep.subr.mxu0 0.0
    %840 = vmatpush1.msra.mxu0 0.0
    %841 = vmatprep.subr.mxu0 0.0
    %842 = vmatpush1.msra.mxu0 0.0
    %843 = vmatprep.subr.mxu0 0.0
    %844 = vmatpush1.msra.mxu0 0.0
    %845 = vmatprep.subr.mxu0 0.0
    %846 = vmatpush1.msra.mxu0 0.0
    %847 = vmatprep.subr.mxu0 0.0
    %848 = vmatpush1.msra.mxu0 0.0
    %849 = vmatprep.subr.mxu0 0.0
    %850 = vmatpush1.msra.mxu0 0.0
    %851 = vmatprep.subr.mxu0 0.0
    %852 = vmatpush1.msra.mxu0 0.0
    %853 = vmatprep.subr.mxu0 0.0
    %854 = vmatpush1.msra.mxu0 0.0
    %855 = vmatprep.subr.mxu0 0.0
    %856 = vmatpush1.msra.mxu0 0.0
    %857 = vmatprep.subr.mxu0 0.0
    %858 = vmatpush1.msra.mxu0 0.0
    %859 = vmatprep.subr.mxu0 0.0
    %860 = vmatpush1.msra.mxu0 0.0
    %861 = vmatprep.subr.mxu0 0.0
    %862 = vmatpush1.msra.mxu0 0.0
    %863 = vmatprep.subr.mxu0 0.0
    %864 = vmatpush1.msra.mxu0 0.0
    %865 = vmatprep.mubr.f32.mxu0 0.0
    %866 = vmatmul.mubr.f32.gmra.mrb[0].mxu0 %v799
    %v867 = vpop.f32.mrb[0].mxu0
    %v868 = vadd.f32 0.0, %v867
    %v869 = vpop.f32.mrb[0].mxu0
    %v870 = vadd.f32 0.0, %v869
    %871 = vdwg.mxu0
    %v872 = vadd.f32 %v209, %v868
    %v873 = vadd.f32 %v211, %v870
    %v874 = vxor.u32 %v872, 2147483648
    %v875 = vxor.u32 %v873, 2147483648
    %v876 = vmul.f32 %v874, 1.442695
    %v877 = vpow.pop %v876
    %v878 = vmul.f32 %v875, 1.442695
    %v879 = vpow.pop %v878
    %v880 = vadd.f32 %v877, 1.0
    %v881 = vadd.f32 %v879, 1.0
    %v882 = vrcp.pop %v880
    %v883 = vmul.f32 1.0, %v882
    %v884 = vrcp.pop %v881
    %v885 = vmul.f32 1.0, %v884
    %v886 = vtanh.pop %v873
    %888 = vrot.lane.b32.xlu0 %v797, 64
    %v889 = vpop.permute.xlu0 %888
    %v891 = vmul.f32 %v883, %v889
    %v892 = vmul.f32 %v883, %v886
    %894 = vrot.lane.b32.xlu0 %v892, 64
    %v895 = vpop.permute.xlu0 %894
    %v897 = vadd.f32 %v891, %v895
    %v898 = vtanh.pop %v897
    %v899 = vmul.f32 %v885, %v898
    %v900 = vsel %vm227, 5, 2
    %vm901 = vcmp.lt.s32.totalorder %v900, %v330
    %903 = vrot.lane.b32.xlu0 %v899, 64
    %v904 = vpop.permute.xlu0 %903
    %v906 = vsel %vm901, %v904, %v792
    %908 = vrot.lane.b32.xlu0 %v897, 64
    %v909 = vpop.permute.xlu0 %908
    %v911 = vsel %vm901, %v909, %v797
    %v913 = vsel %vm228, %v906, 0
    %915 = vmatprep.subr.mxu0 %v44
    %916 = vmatpush1.msra.mxu0 %v43
    %917 = vmatprep.subr.mxu0 %v46
    %918 = vmatpush1.msra.mxu0 %v45
    %919 = vmatprep.subr.mxu0 %v48
    %920 = vmatpush1.msra.mxu0 %v47
    %921 = vmatprep.subr.mxu0 %v50
    %922 = vmatpush1.msra.mxu0 %v49
    %923 = vmatprep.subr.mxu0 %v52
    %924 = vmatpush1.msra.mxu0 %v51
    %925 = vmatprep.subr.mxu0 %v54
    %926 = vmatpush1.msra.mxu0 %v53
    %927 = vmatprep.subr.mxu0 %v56
    %928 = vmatpush1.msra.mxu0 %v55
    %929 = vmatprep.subr.mxu0 %v58
    %930 = vmatpush1.msra.mxu0 %v57
    %931 = vmatprep.subr.mxu0 0.0
    %932 = vmatpush1.msra.mxu0 0.0
    %933 = vmatprep.subr.mxu0 0.0
    %934 = vmatpush1.msra.mxu0 0.0
    %935 = vmatprep.subr.mxu0 0.0
    %936 = vmatpush1.msra.mxu0 0.0
    %937 = vmatprep.subr.mxu0 0.0
    %938 = vmatpush1.msra.mxu0 0.0
    %939 = vmatprep.subr.mxu0 0.0
    %940 = vmatpush1.msra.mxu0 0.0
    %941 = vmatprep.subr.mxu0 0.0
    %942 = vmatpush1.msra.mxu0 0.0
    %943 = vmatprep.subr.mxu0 0.0
    %944 = vmatpush1.msra.mxu0 0.0
    %945 = vmatprep.subr.mxu0 0.0
    %946 = vmatpush1.msra.mxu0 0.0
    %947 = vmatprep.subr.mxu0 0.0
    %948 = vmatpush1.msra.mxu0 0.0
    %949 = vmatprep.subr.mxu0 0.0
    %950 = vmatpush1.msra.mxu0 0.0
    %951 = vmatprep.subr.mxu0 0.0
    %952 = vmatpush1.msra.mxu0 0.0
    %953 = vmatprep.subr.mxu0 0.0
    %954 = vmatpush1.msra.mxu0 0.0
    %955 = vmatprep.subr.mxu0 0.0
    %956 = vmatpush1.msra.mxu0 0.0
    %957 = vmatprep.subr.mxu0 0.0
    %958 = vmatpush1.msra.mxu0 0.0
    %959 = vmatprep.subr.mxu0 0.0
    %960 = vmatpush1.msra.mxu0 0.0
    %961 = vmatprep.subr.mxu0 0.0
    %962 = vmatpush1.msra.mxu0 0.0
    %963 = vmatprep.subr.mxu0 0.0
    %964 = vmatpush1.msra.mxu0 0.0
    %965 = vmatprep.subr.mxu0 0.0
    %966 = vmatpush1.msra.mxu0 0.0
    %967 = vmatprep.subr.mxu0 0.0
    %968 = vmatpush1.msra.mxu0 0.0
    %969 = vmatprep.subr.mxu0 0.0
    %970 = vmatpush1.msra.mxu0 0.0
    %971 = vmatprep.subr.mxu0 0.0
    %972 = vmatpush1.msra.mxu0 0.0
    %973 = vmatprep.subr.mxu0 0.0
    %974 = vmatpush1.msra.mxu0 0.0
    %975 = vmatprep.subr.mxu0 0.0
    %976 = vmatpush1.msra.mxu0 0.0
    %977 = vmatprep.subr.mxu0 0.0
    %978 = vmatpush1.msra.mxu0 0.0
    %979 = vmatprep.mubr.f32.mxu0 0.0
    %980 = vmatmul.mubr.f32.gmra.mrb[0].mxu0 %v913
    %v981 = vpop.f32.mrb[0].mxu0
    %v982 = vadd.f32 0.0, %v981
    %v983 = vpop.f32.mrb[0].mxu0
    %v984 = vadd.f32 0.0, %v983
    %985 = vdwg.mxu0
    %v986 = vadd.f32 %v215, %v982
    %v987 = vadd.f32 %v217, %v984
    %v988 = vxor.u32 %v986, 2147483648
    %v989 = vxor.u32 %v987, 2147483648
    %v990 = vmul.f32 %v988, 1.442695
    %v991 = vpow.pop %v990
    %v992 = vmul.f32 %v989, 1.442695
    %v993 = vpow.pop %v992
    %v994 = vadd.f32 %v991, 1.0
    %v995 = vadd.f32 %v993, 1.0
    %v996 = vrcp.pop %v994
    %v997 = vmul.f32 1.0, %v996
    %v998 = vrcp.pop %v995
    %v999 = vmul.f32 1.0, %v998
    %v1000 = vtanh.pop %v987
    %1002 = vrot.lane.b32.xlu0 %v911, 64
    %v1003 = vpop.permute.xlu0 %1002
    %v1005 = vmul.f32 %v997, %v1003
    %v1006 = vmul.f32 %v997, %v1000
    %1008 = vrot.lane.b32.xlu0 %v1006, 64
    %v1009 = vpop.permute.xlu0 %1008
    %v1011 = vadd.f32 %v1005, %v1009
    %v1012 = vtanh.pop %v1011
    %v1013 = vmul.f32 %v999, %v1012
    %v1014 = vsel %vm227, 6, 1
    %vm1015 = vcmp.lt.s32.totalorder %v1014, %v330
    %1017 = vrot.lane.b32.xlu0 %v1013, 64
    %v1018 = vpop.permute.xlu0 %1017
    %v1020 = vsel %vm1015, %v1018, %v906
    %1022 = vrot.lane.b32.xlu0 %v1011, 64
    %v1023 = vpop.permute.xlu0 %1022
    %v1025 = vsel %vm1015, %v1023, %v911
    %v1027 = vsel %vm228, %v1020, 0
    %1029 = vmatprep.subr.mxu0 %v44
    %1030 = vmatpush1.msra.mxu0 %v43
    %1031 = vmatprep.subr.mxu0 %v46
    %1032 = vmatpush1.msra.mxu0 %v45
    %1033 = vmatprep.subr.mxu0 %v48
    %1034 = vmatpush1.msra.mxu0 %v47
    %1035 = vmatprep.subr.mxu0 %v50
    %1036 = vmatpush1.msra.mxu0 %v49
    %1037 = vmatprep.subr.mxu0 %v52
    %1038 = vmatpush1.msra.mxu0 %v51
    %1039 = vmatprep.subr.mxu0 %v54
    %1040 = vmatpush1.msra.mxu0 %v53
    %1041 = vmatprep.subr.mxu0 %v56
    %1042 = vmatpush1.msra.mxu0 %v55
    %1043 = vmatprep.subr.mxu0 %v58
    %1044 = vmatpush1.msra.mxu0 %v57
    %1045 = vmatprep.subr.mxu0 0.0
    %1046 = vmatpush1.msra.mxu0 0.0
    %1047 = vmatprep.subr.mxu0 0.0
    %1048 = vmatpush1.msra.mxu0 0.0
    %1049 = vmatprep.subr.mxu0 0.0
    %1050 = vmatpush1.msra.mxu0 0.0
    %1051 = vmatprep.subr.mxu0 0.0
    %1052 = vmatpush1.msra.mxu0 0.0
    %1053 = vmatprep.subr.mxu0 0.0
    %1054 = vmatpush1.msra.mxu0 0.0
    %1055 = vmatprep.subr.mxu0 0.0
    %1056 = vmatpush1.msra.mxu0 0.0
    %1057 = vmatprep.subr.mxu0 0.0
    %1058 = vmatpush1.msra.mxu0 0.0
    %1059 = vmatprep.subr.mxu0 0.0
    %1060 = vmatpush1.msra.mxu0 0.0
    %1061 = vmatprep.subr.mxu0 0.0
    %1062 = vmatpush1.msra.mxu0 0.0
    %1063 = vmatprep.subr.mxu0 0.0
    %1064 = vmatpush1.msra.mxu0 0.0
    %1065 = vmatprep.subr.mxu0 0.0
    %1066 = vmatpush1.msra.mxu0 0.0
    %1067 = vmatprep.subr.mxu0 0.0
    %1068 = vmatpush1.msra.mxu0 0.0
    %1069 = vmatprep.subr.mxu0 0.0
    %1070 = vmatpush1.msra.mxu0 0.0
    %1071 = vmatprep.subr.mxu0 0.0
    %1072 = vmatpush1.msra.mxu0 0.0
    %1073 = vmatprep.subr.mxu0 0.0
    %1074 = vmatpush1.msra.mxu0 0.0
    %1075 = vmatprep.subr.mxu0 0.0
    %1076 = vmatpush1.msra.mxu0 0.0
    %1077 = vmatprep.subr.mxu0 0.0
    %1078 = vmatpush1.msra.mxu0 0.0
    %1079 = vmatprep.subr.mxu0 0.0
    %1080 = vmatpush1.msra.mxu0 0.0
    %1081 = vmatprep.subr.mxu0 0.0
    %1082 = vmatpush1.msra.mxu0 0.0
    %1083 = vmatprep.subr.mxu0 0.0
    %1084 = vmatpush1.msra.mxu0 0.0
    %1085 = vmatprep.subr.mxu0 0.0
    %1086 = vmatpush1.msra.mxu0 0.0
    %1087 = vmatprep.subr.mxu0 0.0
    %1088 = vmatpush1.msra.mxu0 0.0
    %1089 = vmatprep.subr.mxu0 0.0
    %1090 = vmatpush1.msra.mxu0 0.0
    %1091 = vmatprep.subr.mxu0 0.0
    %1092 = vmatpush1.msra.mxu0 0.0
    %1093 = vmatprep.mubr.f32.mxu0 0.0
    %1094 = vmatmul.mubr.f32.gmra.mrb[0].mxu0 %v1027
    %v1095 = vpop.f32.mrb[0].mxu0
    %v1096 = vadd.f32 0.0, %v1095
    %v1097 = vpop.f32.mrb[0].mxu0
    %v1098 = vadd.f32 0.0, %v1097
    %1099 = vdwg.mxu0
    %v1100 = vadd.f32 %v221, %v1096
    %v1101 = vadd.f32 %v223, %v1098
    %v1102 = vxor.u32 %v1100, 2147483648
    %v1103 = vxor.u32 %v1101, 2147483648
    %v1104 = vmul.f32 %v1102, 1.442695
    %v1105 = vpow.pop %v1104
    %v1106 = vmul.f32 %v1103, 1.442695
    %v1107 = vpow.pop %v1106
    %v1108 = vadd.f32 %v1105, 1.0
    %v1109 = vadd.f32 %v1107, 1.0
    %v1110 = vrcp.pop %v1108
    %v1111 = vmul.f32 1.0, %v1110
    %v1112 = vrcp.pop %v1109
    %v1113 = vmul.f32 1.0, %v1112
    %v1114 = vtanh.pop %v1101
    %1116 = vrot.lane.b32.xlu0 %v1025, 64
    %v1117 = vpop.permute.xlu0 %1116
    %v1119 = vmul.f32 %v1111, %v1117
    %v1120 = vmul.f32 %v1111, %v1114
    %1122 = vrot.lane.b32.xlu0 %v1120, 64
    %v1123 = vpop.permute.xlu0 %1122
    %v1125 = vadd.f32 %v1119, %v1123
    %v1126 = vtanh.pop %v1125
    %v1127 = vmul.f32 %v1113, %v1126
    %v1128 = vsel %vm227, 7, 0
    %vm1129 = vcmp.lt.s32.totalorder %v1128, %v330
    %1131 = vrot.lane.b32.xlu0 %v1127, 64
    %v1132 = vpop.permute.xlu0 %1131
    %v1134 = vsel %vm1129, %v1132, %v1020
    %v1135 = vld [vmem:[%s5] sm:$0xff]
    %v1136 = vld [vmem:[%s5 + $0x8] sm:$0xff]
    %v1137 = vld [vmem:[%s5 + $0x10] sm:$0xff]
    %v1138 = vld [vmem:[%s5 + $0x18] sm:$0xff]
    %v1139 = vld [vmem:[%s5 + $0x20] sm:$0xff]
    %v1140 = vld [vmem:[%s5 + $0x28] sm:$0xff]
    %v1141 = vld [vmem:[%s5 + $0x30] sm:$0xff]
    %v1142 = vld [vmem:[%s5 + $0x38] sm:$0xff]
    %v1143 = vld [vmem:[#allocation2] sm:$0x1]
    %v1145 = vlaneseq
    %v1146 = vshrl.u32 %v1145, 7
    %v1147 = vsub.s32 0, %v1146
    %v1148 = vrot.slane %v1143, %v1147
    %v1151 = vsel %vm228, %v1134, 0
    %1153 = vmatprep.subr.mxu0 0.0
    %1154 = vmatpush1.msra.mxu0 %v1135
    %1155 = vmatprep.subr.mxu0 0.0
    %1156 = vmatpush1.msra.mxu0 %v1136
    %1157 = vmatprep.subr.mxu0 0.0
    %1158 = vmatpush1.msra.mxu0 %v1137
    %1159 = vmatprep.subr.mxu0 0.0
    %1160 = vmatpush1.msra.mxu0 %v1138
    %1161 = vmatprep.subr.mxu0 0.0
    %1162 = vmatpush1.msra.mxu0 %v1139
    %1163 = vmatprep.subr.mxu0 0.0
    %1164 = vmatpush1.msra.mxu0 %v1140
    %1165 = vmatprep.subr.mxu0 0.0
    %1166 = vmatpush1.msra.mxu0 %v1141
    %1167 = vmatprep.subr.mxu0 0.0
    %1168 = vmatpush1.msra.mxu0 %v1142
    %1169 = vmatprep.subr.mxu0 0.0
    %1170 = vmatpush1.msra.mxu0 0.0
    %1171 = vmatprep.subr.mxu0 0.0
    %1172 = vmatpush1.msra.mxu0 0.0
    %1173 = vmatprep.subr.mxu0 0.0
    %1174 = vmatpush1.msra.mxu0 0.0
    %1175 = vmatprep.subr.mxu0 0.0
    %1176 = vmatpush1.msra.mxu0 0.0
    %1177 = vmatprep.subr.mxu0 0.0
    %1178 = vmatpush1.msra.mxu0 0.0
    %1179 = vmatprep.subr.mxu0 0.0
    %1180 = vmatpush1.msra.mxu0 0.0
    %1181 = vmatprep.subr.mxu0 0.0
    %1182 = vmatpush1.msra.mxu0 0.0
    %1183 = vmatprep.subr.mxu0 0.0
    %1184 = vmatpush1.msra.mxu0 0.0
    %1185 = vmatprep.subr.mxu0 0.0
    %1186 = vmatpush1.msra.mxu0 0.0
    %1187 = vmatprep.subr.mxu0 0.0
    %1188 = vmatpush1.msra.mxu0 0.0
    %1189 = vmatprep.subr.mxu0 0.0
    %1190 = vmatpush1.msra.mxu0 0.0
    %1191 = vmatprep.subr.mxu0 0.0
    %1192 = vmatpush1.msra.mxu0 0.0
    %1193 = vmatprep.subr.mxu0 0.0
    %1194 = vmatpush1.msra.mxu0 0.0
    %1195 = vmatprep.subr.mxu0 0.0
    %1196 = vmatpush1.msra.mxu0 0.0
    %1197 = vmatprep.subr.mxu0 0.0
    %1198 = vmatpush1.msra.mxu0 0.0
    %1199 = vmatprep.subr.mxu0 0.0
    %1200 = vmatpush1.msra.mxu0 0.0
    %1201 = vmatprep.subr.mxu0 0.0
    %1202 = vmatpush1.msra.mxu0 0.0
    %1203 = vmatprep.subr.mxu0 0.0
    %1204 = vmatpush1.msra.mxu0 0.0
    %1205 = vmatprep.subr.mxu0 0.0
    %1206 = vmatpush1.msra.mxu0 0.0
    %1207 = vmatprep.subr.mxu0 0.0
    %1208 = vmatpush1.msra.mxu0 0.0
    %1209 = vmatprep.subr.mxu0 0.0
    %1210 = vmatpush1.msra.mxu0 0.0
    %1211 = vmatprep.subr.mxu0 0.0
    %1212 = vmatpush1.msra.mxu0 0.0
    %1213 = vmatprep.subr.mxu0 0.0
    %1214 = vmatpush1.msra.mxu0 0.0
    %1215 = vmatprep.subr.mxu0 0.0
    %1216 = vmatpush1.msra.mxu0 0.0
    %1217 = vmatprep.mubr.f32.mxu0 0.0
    %1218 = vmatmul.mubr.f32.gmra.mrb[0].mxu0 %v1151
    %v1219 = vpop.f32.mrb[0].mxu0
    %v1220 = vadd.f32 %v1148, %v1219
    %v1221 = vpop.f32.mrb[0].mxu0
    %1222 = vdwg.mxu0
    %v1223 = vxor.u32 %v1220, 2147483648
    %v1224 = vmul.f32 %v1223, 1.442695
    %v1225 = vpow.pop %v1224
    %v1226 = vadd.f32 %v1225, 1.0
    %v1227 = vrcp.pop %v1226
    %v1228 = vmul.f32 1.0, %v1227
    %vm1229 = vcmask 7168
    %1230 = vst.msk [vmem:[%s7] sm:$0xff] %vm1229, %v1228
    // Predicated region
    $region34: #{tpu_custom_call.1} parent=1 // pred_check
      _
    $region35: #{tpu_custom_call.1} parent=1 // pred_check_branch
      %1232 = sbr.rel (0) target = $region37
    $region36: #{tpu_custom_call.1} parent=1 // pred_region
      _
    $region37: #{tpu_custom_call.1} parent=1 // pred_fallthru
      _
    // Predicated region
    $region38: #{tpu_custom_call.1} parent=1 // pred_check
      _
    $region39: #{tpu_custom_call.1} parent=1 // pred_check_branch
      %1234 = sbr.rel (0) target = $region41
    $region40: #{tpu_custom_call.1} parent=1 // pred_region
      _
    $region41: #{tpu_custom_call.1} parent=1 // pred_fallthru
      _
    %1235 = vsyncpa [#allocation4], 1

</llo_original>
